<compile_context>
chip_gen: v7x
topology: tpu7x:2x2x1
jax: 0.10.0
libtpu: 0.0.40
codegen_flags: <defaults>
</compile_context>

<pallas_src>
import functools

import jax
import jax.numpy as jnp
import numpy as np
from jax.experimental import pallas as pl
from jax.experimental.pallas import tpu as pltpu

EPS = 1e-5
LANES = 128


def _round_up(x, m):
    return (x + m - 1) // m * m


def _fused_temporal_conv_kernel(
        col1_ref,            # (B*T1, KCp)  packed block-1 im2col (built by XLA in wrapper)
        w1_ref,              # (KCp, Hp)    block-1 conv weight, rows match col1 packing
        g1_ref, be1_ref,     # (1, Hp)      BN1 gamma / beta (zero-padded lanes)
        w2_ref,              # (K*Hp, Hp)   block-2 conv weight, tap-major rows
        g2_ref, be2_ref,     # (1, Hp)
        o_ref,               # (B*L2, Hp)   output, flattened over (B, L2)
        act1_ref, pool1_ref, act2_ref,      # f32 VMEM scratch
        *, B, T1, Hp, K):
    L1 = T1 // 2
    T2 = L1 - K + 1
    L2 = T2 // 2
    M1 = B * T1
    M2 = B * T2

    # ---- block 1: Conv (one lane-dense MXU matmul) -> BN(train) -> ReLU -> MaxPool(2) ----
    # Conv bias is intentionally omitted: training-mode BatchNorm cancels a pre-BN
    # per-channel bias exactly (mean absorbs it, variance is shift-invariant).
    act1_ref[...] = jnp.dot(col1_ref[...], w1_ref[...],
                            preferred_element_type=jnp.float32)

    # One-pass batch statistics: sum and sum-of-squares together; var = E[y^2] - mean^2.
    y1 = act1_ref[...]
    s1 = jnp.sum(y1, axis=0, keepdims=True)
    ss1 = jnp.sum(y1 * y1, axis=0, keepdims=True)
    mean1 = s1 * (1.0 / M1)
    var1 = jnp.maximum(ss1 * (1.0 / M1) - mean1 * mean1, 0.0)
    scale1 = g1_ref[...] * jax.lax.rsqrt(var1 + EPS)   # padded lanes: gamma==0 -> scale==0
    shift1 = be1_ref[...] - mean1 * scale1
    act1_ref[...] = jnp.maximum(act1_ref[...] * scale1 + shift1, 0.0)

    # MaxPool1d(2): even/odd stride-2 reads + one max + one lane-dense store.
    # T1 is even, so the global stride-2 pattern stays batch-aligned.
    pool1_ref[...] = jnp.maximum(act1_ref[pl.ds(0, B * L1, stride=2), :],
                                 act1_ref[pl.ds(1, B * L1, stride=2), :])

    # ---- block 2: Conv as K shifted-matmul accumulations -> BN -> ReLU -> MaxPool(2) ----
    # No im2col slab: for each tap k, multiply the k-shifted pool1 rows by w2[k] and
    # accumulate into the f32 act2 scratch.  k is the outer loop so the (Hp, Hp) weight
    # tile is reused across batches.
    mm_dtype = w2_ref.dtype
    act2_ref[...] = jnp.zeros_like(act2_ref)
    for k in range(K):
        wk = w2_ref[k * Hp:(k + 1) * Hp, :]
        # TODO(synk): for large B switch this to lax.fori_loop / a "parallel" batch-tile
        # grid axis (two-phase BN stats) so v7x's second TensorCore is used and code size
        # stays bounded.
        for b in range(B):
            r_in = b * L1 + k
            r_out = b * T2
            act2_ref[r_out:r_out + T2, :] += jnp.dot(
                pool1_ref[r_in:r_in + T2, :].astype(mm_dtype), wk,
                preferred_element_type=jnp.float32)

    y2 = act2_ref[...]
    s2 = jnp.sum(y2, axis=0, keepdims=True)
    ss2 = jnp.sum(y2 * y2, axis=0, keepdims=True)
    mean2 = s2 * (1.0 / M2)
    var2 = jnp.maximum(ss2 * (1.0 / M2) - mean2 * mean2, 0.0)
    scale2 = g2_ref[...] * jax.lax.rsqrt(var2 + EPS)
    shift2 = be2_ref[...] - mean2 * scale2
    act2_ref[...] = jnp.maximum(act2_ref[...] * scale2 + shift2, 0.0)

    o_ref[...] = jnp.maximum(act2_ref[pl.ds(0, B * L2, stride=2), :],
                             act2_ref[pl.ds(1, B * L2, stride=2), :])


@functools.partial(jax.jit, static_argnames=("matmul_dtype",))
def temporal_conv_forward(x, params, matmul_dtype=jnp.float32):
    """TemporalConv(conv_type=2).forward on x of shape (B, T, input_size).

    Conv weights in `params` are stored as (K, C_in, H) (== PyTorch Conv1d weight
    (H, C_in, K) transposed); BN gamma/beta as (1, H).  Conv biases b1/b2 may be
    present in `params` but are intentionally unused: training-mode BatchNorm
    cancels a pre-BN per-channel bias exactly.

    `matmul_dtype`: dtype of the MXU operands.  bf16 is the v6e/v7x recommendation
    (full-rate MXU, half the operand VMEM); accumulation is always f32.
    """
    B, T, C = x.shape
    K, _, H = params["w1"].shape

    T1 = T - K + 1
    if T1 < 2 or T1 % 2:
        raise ValueError("conv-1 output length must be even and >= 2")
    L1 = T1 // 2
    T2 = L1 - K + 1
    if T2 < 2 or T2 % 2:
        raise ValueError("conv-2 output length must be even and >= 2")
    L2 = T2 // 2
    # TODO(synk): odd conv-output lengths (PyTorch ceil_mode=False drops the last frame)
    # would need a per-batch pooling path instead of the global stride-2 trick.

    # ---- layout plumbing (XLA side): pack + pad so every kernel tile is lane-dense ----
    KC = K * C
    KCp = _round_up(KC, LANES)      # block-1 contraction: pad K*C ONCE to 128 lanes
    Hp = _round_up(H, LANES)

    xf = x.astype(jnp.float32)
    # Packed im2col for block 1: lane index k*C + c, padded to KCp.
    col1 = jnp.concatenate([xf[:, k:k + T1, :] for k in range(K)], axis=-1)
    col1 = jnp.pad(col1, ((0, 0), (0, 0), (0, KCp - KC)))
    col1 = col1.reshape(B * T1, KCp).astype(matmul_dtype)

    # w1: (K, C, H) -> (K*C, H), row index k*C + c matching col1's packing; zero-pad.
    w1 = params["w1"].astype(jnp.float32).reshape(KC, H)
    w1 = jnp.pad(w1, ((0, KCp - KC), (0, Hp - H))).astype(matmul_dtype)

    # w2: (K, H, H) -> zero-pad channels -> (K*Hp, Hp), tap-major rows.
    w2 = jnp.pad(params["w2"].astype(jnp.float32),
                 ((0, 0), (0, Hp - H), (0, Hp - H))).reshape(K * Hp, Hp)
    w2 = w2.astype(matmul_dtype)

    # Padded-lane invariant: gamma/beta are ZERO-padded (not ones) so padded output lanes
    # stay exactly zero through BN/ReLU/pool and are sliced away below.
    def pad_h(v):
        return jnp.pad(v.astype(jnp.float32), ((0, 0), (0, Hp - H)))

    g1, be1 = pad_h(params["g1"]), pad_h(params["be1"])
    g2, be2 = pad_h(params["g2"]), pad_h(params["be2"])

    kernel = functools.partial(_fused_temporal_conv_kernel, B=B, T1=T1, Hp=Hp, K=K)

    # Whole-array VMEM residency (tiny footprint here).  At toy shapes this call is
    # latency-bound (M1 = B*T1 rows barely touches the MXU) — fold more batch per call
    # before micro-tuning.
    # TODO(synk): at large B*T add a batch-tile grid axis marked "parallel" (K-1 time halo,
    # two-phase BN stats) so both v7x TensorCores run; re-budget for v7x's 64 MiB VMEM.
    out = pl.pallas_call(
        kernel,
        out_shape=jax.ShapeDtypeStruct((B * L2, Hp), jnp.float32),
        in_specs=[pl.BlockSpec(memory_space=pltpu.MemorySpace.VMEM)] * 7,
        out_specs=pl.BlockSpec(memory_space=pltpu.MemorySpace.VMEM),
        scratch_shapes=[
            pltpu.VMEM((B * T1, Hp), jnp.float32),   # act1 (conv1 out; BN+ReLU in place)
            pltpu.VMEM((B * L1, Hp), jnp.float32),   # pool1
            pltpu.VMEM((B * T2, Hp), jnp.float32),   # act2 (accumulator; BN+ReLU in place)
        ],
        compiler_params=pltpu.CompilerParams(
            vmem_limit_bytes=48 * 1024 * 1024),      # fits v7x's 64 MiB/TC; ample on v5e/v6e
    )(col1, w1, g1, be1, w2, g2, be2)

    return out.reshape(B, L2, Hp)[:, :, :H]


# ----------------------- pure-JAX reference for checking ---------------------
def _ref_block(x, w, b, g, beta):
    B, T, _ = x.shape
    K, _, H = w.shape
    T_out = T - K + 1
    y = jnp.zeros((B, T_out, H), jnp.float32)
    for k in range(K):
        y = y + jnp.einsum("btc,ch->bth", x[:, k:k + T_out, :], w[k])
    y = y + b[None]                        # reference keeps the conv bias (BN cancels it)
    mean = y.mean(axis=(0, 1), keepdims=True)
    var = ((y - mean) ** 2).mean(axis=(0, 1), keepdims=True)
    y = (y - mean) * jax.lax.rsqrt(var + EPS) * g[None] + beta[None]
    y = jnp.maximum(y, 0.0)
    L = T_out // 2
    return y[:, :2 * L, :].reshape(B, L, 2, H).max(axis=2)


def _ref_forward(x, p):
    y = _ref_block(x, p["w1"], p["b1"], p["g1"], p["be1"])
    y = _ref_block(y, p["w2"], p["b2"], p["g2"], p["be2"])
    return y


if __name__ == "__main__":
    B, T, input_size, hidden = 2, 16, 4, 32
    K = 5

    key = jax.random.PRNGKey(0)
    ks = jax.random.split(key, 9)

    params = {
        # conv weights stored as (K, C_in, H)  (== PyTorch (H, C_in, K) transposed)
        "w1": 0.1 * jax.random.normal(ks[0], (K, input_size, hidden), jnp.float32),
        "b1": 0.1 * jax.random.normal(ks[1], (1, hidden), jnp.float32),
        "g1": 1.0 + 0.1 * jax.random.normal(ks[2], (1, hidden), jnp.float32),
        "be1": 0.1 * jax.random.normal(ks[3], (1, hidden), jnp.float32),
        "w2": 0.1 * jax.random.normal(ks[4], (K, hidden, hidden), jnp.float32),
        "b2": 0.1 * jax.random.normal(ks[5], (1, hidden), jnp.float32),
        "g2": 1.0 + 0.1 * jax.random.normal(ks[6], (1, hidden), jnp.float32),
        "be2": 0.1 * jax.random.normal(ks[7], (1, hidden), jnp.float32),
    }
    x = jax.random.normal(ks[8], (B, T, input_size), jnp.float32)

    ref = jax.block_until_ready(_ref_forward(x, params))
    L2_expected = ((T - K + 1) // 2 - K + 1) // 2

    # f32 MXU-operand path (v5e default): tight tolerance vs. the f32 reference.
    out_f32 = jax.block_until_ready(
        temporal_conv_forward(x, params, matmul_dtype=jnp.float32))
    assert out_f32.shape == (B, L2_expected, hidden), out_f32.shape
    np.testing.assert_allclose(np.asarray(out_f32), np.asarray(ref),
                               rtol=5e-4, atol=5e-4)

    # bf16 MXU-operand path (v6e/v7x recommendation): f32 accumulation, looser tolerance.
    out_bf16 = jax.block_until_ready(
        temporal_conv_forward(x, params, matmul_dtype=jnp.bfloat16))
    assert out_bf16.shape == (B, L2_expected, hidden), out_bf16.shape
    np.testing.assert_allclose(np.asarray(out_bf16), np.asarray(ref),
                               rtol=3e-2, atol=3e-2)

    print("KERNEL_OK")
</pallas_src>

<mosaic_0001>
module attributes {stable_mosaic.version = 11 : i64} {
  func.func @_fused_temporal_conv_kernel(%arg0: memref<24x128xf32, #tpu.memory_space<vmem>>, %arg1: memref<128x128xf32, #tpu.memory_space<vmem>>, %arg2: memref<1x128xf32, #tpu.memory_space<vmem>>, %arg3: memref<1x128xf32, #tpu.memory_space<vmem>>, %arg4: memref<640x128xf32, #tpu.memory_space<vmem>>, %arg5: memref<1x128xf32, #tpu.memory_space<vmem>>, %arg6: memref<1x128xf32, #tpu.memory_space<vmem>>, %arg7: memref<2x128xf32, #tpu.memory_space<vmem>>, %arg8: memref<24x128xf32, #tpu.memory_space<vmem>>, %arg9: memref<12x128xf32, #tpu.memory_space<vmem>>, %arg10: memref<4x128xf32, #tpu.memory_space<vmem>>) attributes {dimension_semantics = [], scalar_prefetch = 0 : i64, scratch_operands = 3 : i64, tpu.core_type = #tpu.core_type<tc>} {
    %c0 = arith.constant 0 : index
    %c0_0 = arith.constant 0 : index
    %0 = vector.load %arg0[%c0, %c0_0] : memref<24x128xf32, #tpu.memory_space<vmem>>, vector<24x128xf32>
    %c0_1 = arith.constant 0 : index
    %c0_2 = arith.constant 0 : index
    %1 = vector.load %arg1[%c0_1, %c0_2] : memref<128x128xf32, #tpu.memory_space<vmem>>, vector<128x128xf32>
    %cst = arith.constant dense<0.000000e+00> : vector<24x128xf32>
    %2 = tpu.matmul %0, %1, %cst {dimension_numbers = #tpu.dot_dimension_numbers<[1], [0], [0], [1], [0, 0, 1, 1], [], []>} : vector<24x128xf32>, vector<128x128xf32>, vector<24x128xf32> -> vector<24x128xf32>
    %c0_3 = arith.constant 0 : index
    %c0_4 = arith.constant 0 : index
    %3 = vector.load %arg8[%c0_3, %c0_4] : memref<24x128xf32, #tpu.memory_space<vmem>>, vector<24x128xf32>
    tpu.vector_store %arg8[%c0_3, %c0_4], %2 {strides = array<i32>} : memref<24x128xf32, #tpu.memory_space<vmem>>, vector<24x128xf32>,
    %c0_5 = arith.constant 0 : index
    %c0_6 = arith.constant 0 : index
    %4 = vector.load %arg8[%c0_5, %c0_6] : memref<24x128xf32, #tpu.memory_space<vmem>>, vector<24x128xf32>
    %cst_7 = arith.constant dense<0.000000e+00> : vector<128xf32>
    %5 = vector.multi_reduction <add>, %4, %cst_7 [0] : vector<24x128xf32> to vector<128xf32>
    %6 = vector.shape_cast %5 : vector<128xf32> to vector<1x128xf32>
    %7 = arith.mulf %4, %4 : vector<24x128xf32>
    %cst_8 = arith.constant dense<0.000000e+00> : vector<128xf32>
    %8 = vector.multi_reduction <add>, %7, %cst_8 [0] : vector<24x128xf32> to vector<128xf32>
    %9 = vector.shape_cast %8 : vector<128xf32> to vector<1x128xf32>
    %cst_9 = arith.constant 0.0416666679 : f32
    %10 = vector.broadcast %cst_9 : f32 to vector<1x128xf32>
    %11 = arith.mulf %6, %10 : vector<1x128xf32>
    %cst_10 = arith.constant 0.0416666679 : f32
    %12 = vector.broadcast %cst_10 : f32 to vector<1x128xf32>
    %13 = arith.mulf %9, %12 : vector<1x128xf32>
    %14 = arith.mulf %11, %11 : vector<1x128xf32>
    %15 = arith.subf %13, %14 : vector<1x128xf32>
    %cst_11 = arith.constant 0.000000e+00 : f32
    %16 = vector.broadcast %cst_11 : f32 to vector<1x128xf32>
    %17 = arith.maximumf %15, %16 : vector<1x128xf32>
    %c0_12 = arith.constant 0 : index
    %c0_13 = arith.constant 0 : index
    %18 = vector.load %arg2[%c0_12, %c0_13] : memref<1x128xf32, #tpu.memory_space<vmem>>, vector<1x128xf32>
    %cst_14 = arith.constant 9.99999974E-6 : f32
    %19 = vector.broadcast %cst_14 : f32 to vector<1x128xf32>
    %20 = arith.addf %17, %19 : vector<1x128xf32>
    %21 = math.rsqrt %20 : vector<1x128xf32>
    %22 = arith.mulf %18, %21 : vector<1x128xf32>
    %c0_15 = arith.constant 0 : index
    %c0_16 = arith.constant 0 : index
    %23 = vector.load %arg3[%c0_15, %c0_16] : memref<1x128xf32, #tpu.memory_space<vmem>>, vector<1x128xf32>
    %24 = arith.mulf %11, %22 : vector<1x128xf32>
    %25 = arith.subf %23, %24 : vector<1x128xf32>
    %c0_17 = arith.constant 0 : index
    %c0_18 = arith.constant 0 : index
    %26 = vector.load %arg8[%c0_17, %c0_18] : memref<24x128xf32, #tpu.memory_space<vmem>>, vector<24x128xf32>
    %27 = vector.broadcast %22 : vector<1x128xf32> to vector<24x128xf32>
    %28 = arith.mulf %26, %27 : vector<24x128xf32>
    %29 = vector.broadcast %25 : vector<1x128xf32> to vector<24x128xf32>
    %30 = arith.addf %28, %29 : vector<24x128xf32>
    %cst_19 = arith.constant 0.000000e+00 : f32
    %31 = vector.broadcast %cst_19 : f32 to vector<24x128xf32>
    %32 = arith.maximumf %30, %31 : vector<24x128xf32>
    %c0_20 = arith.constant 0 : index
    %c0_21 = arith.constant 0 : index
    %33 = vector.load %arg8[%c0_20, %c0_21] : memref<24x128xf32, #tpu.memory_space<vmem>>, vector<24x128xf32>
    tpu.vector_store %arg8[%c0_20, %c0_21], %32 {strides = array<i32>} : memref<24x128xf32, #tpu.memory_space<vmem>>, vector<24x128xf32>,
    %c0_22 = arith.constant 0 : index
    %c0_23 = arith.constant 0 : index
    %34 = tpu.strided_load %arg8[%c0_22, %c0_23] {strides = array<i32: 2, 1>} : memref<24x128xf32, #tpu.memory_space<vmem>>, vector<12x128xf32>
    %c1 = arith.constant 1 : index
    %c0_24 = arith.constant 0 : index
    %35 = tpu.strided_load %arg8[%c1, %c0_24] {strides = array<i32: 2, 1>} : memref<24x128xf32, #tpu.memory_space<vmem>>, vector<12x128xf32>
    %36 = arith.maximumf %34, %35 : vector<12x128xf32>
    %c0_25 = arith.constant 0 : index
    %c0_26 = arith.constant 0 : index
    %37 = vector.load %arg9[%c0_25, %c0_26] : memref<12x128xf32, #tpu.memory_space<vmem>>, vector<12x128xf32>
    tpu.vector_store %arg9[%c0_25, %c0_26], %36 {strides = array<i32>} : memref<12x128xf32, #tpu.memory_space<vmem>>, vector<12x128xf32>,
    %cst_27 = arith.constant 0.000000e+00 : f32
    %38 = vector.broadcast %cst_27 : f32 to vector<4x128xf32>
    %c0_28 = arith.constant 0 : index
    %c0_29 = arith.constant 0 : index
    %39 = vector.load %arg10[%c0_28, %c0_29] : memref<4x128xf32, #tpu.memory_space<vmem>>, vector<4x128xf32>
    tpu.vector_store %arg10[%c0_28, %c0_29], %38 {strides = array<i32>} : memref<4x128xf32, #tpu.memory_space<vmem>>, vector<4x128xf32>,
    %c0_30 = arith.constant 0 : index
    %c0_31 = arith.constant 0 : index
    %40 = vector.load %arg4[%c0_30, %c0_31] : memref<640x128xf32, #tpu.memory_space<vmem>>, vector<128x128xf32>
    %c0_32 = arith.constant 0 : index
    %c0_33 = arith.constant 0 : index
    %41 = vector.load %arg10[%c0_32, %c0_33] : memref<4x128xf32, #tpu.memory_space<vmem>>, vector<2x128xf32>
    %c0_34 = arith.constant 0 : index
    %c0_35 = arith.constant 0 : index
    %42 = vector.load %arg9[%c0_34, %c0_35] : memref<12x128xf32, #tpu.memory_space<vmem>>, vector<2x128xf32>
    %cst_36 = arith.constant dense<0.000000e+00> : vector<2x128xf32>
    %43 = tpu.matmul %42, %40, %cst_36 {dimension_numbers = #tpu.dot_dimension_numbers<[1], [0], [0], [1], [0, 0, 1, 1], [], []>} : vector<2x128xf32>, vector<128x128xf32>, vector<2x128xf32> -> vector<2x128xf32>
    %44 = arith.addf %41, %43 : vector<2x128xf32>
    %c0_37 = arith.constant 0 : index
    %c0_38 = arith.constant 0 : index
    %45 = vector.load %arg10[%c0_37, %c0_38] : memref<4x128xf32, #tpu.memory_space<vmem>>, vector<2x128xf32>
    tpu.vector_store %arg10[%c0_37, %c0_38], %44 {strides = array<i32>} : memref<4x128xf32, #tpu.memory_space<vmem>>, vector<2x128xf32>,
    %c2 = arith.constant 2 : index
    %c0_39 = arith.constant 0 : index
    %46 = vector.load %arg10[%c2, %c0_39] : memref<4x128xf32, #tpu.memory_space<vmem>>, vector<2x128xf32>
    %c6 = arith.constant 6 : index
    %c0_40 = arith.constant 0 : index
    %47 = vector.load %arg9[%c6, %c0_40] : memref<12x128xf32, #tpu.memory_space<vmem>>, vector<2x128xf32>
    %cst_41 = arith.constant dense<0.000000e+00> : vector<2x128xf32>
    %48 = tpu.matmul %47, %40, %cst_41 {dimension_numbers = #tpu.dot_dimension_numbers<[1], [0], [0], [1], [0, 0, 1, 1], [], []>} : vector<2x128xf32>, vector<128x128xf32>, vector<2x128xf32> -> vector<2x128xf32>
    %49 = arith.addf %46, %48 : vector<2x128xf32>
    %c2_42 = arith.constant 2 : index
    %c0_43 = arith.constant 0 : index
    %50 = vector.load %arg10[%c2_42, %c0_43] : memref<4x128xf32, #tpu.memory_space<vmem>>, vector<2x128xf32>
    tpu.vector_store %arg10[%c2_42, %c0_43], %49 {strides = array<i32>} : memref<4x128xf32, #tpu.memory_space<vmem>>, vector<2x128xf32>,
    %c128 = arith.constant 128 : index
    %c0_44 = arith.constant 0 : index
    %51 = vector.load %arg4[%c128, %c0_44] : memref<640x128xf32, #tpu.memory_space<vmem>>, vector<128x128xf32>
    %c0_45 = arith.constant 0 : index
    %c0_46 = arith.constant 0 : index
    %52 = vector.load %arg10[%c0_45, %c0_46] : memref<4x128xf32, #tpu.memory_space<vmem>>, vector<2x128xf32>
    %c1_47 = arith.constant 1 : index
    %c0_48 = arith.constant 0 : index
    %53 = vector.load %arg9[%c1_47, %c0_48] : memref<12x128xf32, #tpu.memory_space<vmem>>, vector<2x128xf32>
    %cst_49 = arith.constant dense<0.000000e+00> : vector<2x128xf32>
    %54 = tpu.matmul %53, %51, %cst_49 {dimension_numbers = #tpu.dot_dimension_numbers<[1], [0], [0], [1], [0, 0, 1, 1], [], []>} : vector<2x128xf32>, vector<128x128xf32>, vector<2x128xf32> -> vector<2x128xf32>
    %55 = arith.addf %52, %54 : vector<2x128xf32>
    %c0_50 = arith.constant 0 : index
    %c0_51 = arith.constant 0 : index
    %56 = vector.load %arg10[%c0_50, %c0_51] : memref<4x128xf32, #tpu.memory_space<vmem>>, vector<2x128xf32>
    tpu.vector_store %arg10[%c0_50, %c0_51], %55 {strides = array<i32>} : memref<4x128xf32, #tpu.memory_space<vmem>>, vector<2x128xf32>,
    %c2_52 = arith.constant 2 : index
    %c0_53 = arith.constant 0 : index
    %57 = vector.load %arg10[%c2_52, %c0_53] : memref<4x128xf32, #tpu.memory_space<vmem>>, vector<2x128xf32>
    %c7 = arith.constant 7 : index
    %c0_54 = arith.constant 0 : index
    %58 = vector.load %arg9[%c7, %c0_54] : memref<12x128xf32, #tpu.memory_space<vmem>>, vector<2x128xf32>
    %cst_55 = arith.constant dense<0.000000e+00> : vector<2x128xf32>
    %59 = tpu.matmul %58, %51, %cst_55 {dimension_numbers = #tpu.dot_dimension_numbers<[1], [0], [0], [1], [0, 0, 1, 1], [], []>} : vector<2x128xf32>, vector<128x128xf32>, vector<2x128xf32> -> vector<2x128xf32>
    %60 = arith.addf %57, %59 : vector<2x128xf32>
    %c2_56 = arith.constant 2 : index
    %c0_57 = arith.constant 0 : index
    %61 = vector.load %arg10[%c2_56, %c0_57] : memref<4x128xf32, #tpu.memory_space<vmem>>, vector<2x128xf32>
    tpu.vector_store %arg10[%c2_56, %c0_57], %60 {strides = array<i32>} : memref<4x128xf32, #tpu.memory_space<vmem>>, vector<2x128xf32>,
    %c256 = arith.constant 256 : index
    %c0_58 = arith.constant 0 : index
    %62 = vector.load %arg4[%c256, %c0_58] : memref<640x128xf32, #tpu.memory_space<vmem>>, vector<128x128xf32>
    %c0_59 = arith.constant 0 : index
    %c0_60 = arith.constant 0 : index
    %63 = vector.load %arg10[%c0_59, %c0_60] : memref<4x128xf32, #tpu.memory_space<vmem>>, vector<2x128xf32>
    %c2_61 = arith.constant 2 : index
    %c0_62 = arith.constant 0 : index
    %64 = vector.load %arg9[%c2_61, %c0_62] : memref<12x128xf32, #tpu.memory_space<vmem>>, vector<2x128xf32>
    %cst_63 = arith.constant dense<0.000000e+00> : vector<2x128xf32>
    %65 = tpu.matmul %64, %62, %cst_63 {dimension_numbers = #tpu.dot_dimension_numbers<[1], [0], [0], [1], [0, 0, 1, 1], [], []>} : vector<2x128xf32>, vector<128x128xf32>, vector<2x128xf32> -> vector<2x128xf32>
    %66 = arith.addf %63, %65 : vector<2x128xf32>
    %c0_64 = arith.constant 0 : index
    %c0_65 = arith.constant 0 : index
    %67 = vector.load %arg10[%c0_64, %c0_65] : memref<4x128xf32, #tpu.memory_space<vmem>>, vector<2x128xf32>
    tpu.vector_store %arg10[%c0_64, %c0_65], %66 {strides = array<i32>} : memref<4x128xf32, #tpu.memory_space<vmem>>, vector<2x128xf32>,
    %c2_66 = arith.constant 2 : index
    %c0_67 = arith.constant 0 : index
    %68 = vector.load %arg10[%c2_66, %c0_67] : memref<4x128xf32, #tpu.memory_space<vmem>>, vector<2x128xf32>
    %c8 = arith.constant 8 : index
    %c0_68 = arith.constant 0 : index
    %69 = vector.load %arg9[%c8, %c0_68] : memref<12x128xf32, #tpu.memory_space<vmem>>, vector<2x128xf32>
    %cst_69 = arith.constant dense<0.000000e+00> : vector<2x128xf32>
    %70 = tpu.matmul %69, %62, %cst_69 {dimension_numbers = #tpu.dot_dimension_numbers<[1], [0], [0], [1], [0, 0, 1, 1], [], []>} : vector<2x128xf32>, vector<128x128xf32>, vector<2x128xf32> -> vector<2x128xf32>
    %71 = arith.addf %68, %70 : vector<2x128xf32>
    %c2_70 = arith.constant 2 : index
    %c0_71 = arith.constant 0 : index
    %72 = vector.load %arg10[%c2_70, %c0_71] : memref<4x128xf32, #tpu.memory_space<vmem>>, vector<2x128xf32>
    tpu.vector_store %arg10[%c2_70, %c0_71], %71 {strides = array<i32>} : memref<4x128xf32, #tpu.memory_space<vmem>>, vector<2x128xf32>,
    %c384 = arith.constant 384 : index
    %c0_72 = arith.constant 0 : index
    %73 = vector.load %arg4[%c384, %c0_72] : memref<640x128xf32, #tpu.memory_space<vmem>>, vector<128x128xf32>
    %c0_73 = arith.constant 0 : index
    %c0_74 = arith.constant 0 : index
    %74 = vector.load %arg10[%c0_73, %c0_74] : memref<4x128xf32, #tpu.memory_space<vmem>>, vector<2x128xf32>
    %c3 = arith.constant 3 : index
    %c0_75 = arith.constant 0 : index
    %75 = vector.load %arg9[%c3, %c0_75] : memref<12x128xf32, #tpu.memory_space<vmem>>, vector<2x128xf32>
    %cst_76 = arith.constant dense<0.000000e+00> : vector<2x128xf32>
    %76 = tpu.matmul %75, %73, %cst_76 {dimension_numbers = #tpu.dot_dimension_numbers<[1], [0], [0], [1], [0, 0, 1, 1], [], []>} : vector<2x128xf32>, vector<128x128xf32>, vector<2x128xf32> -> vector<2x128xf32>
    %77 = arith.addf %74, %76 : vector<2x128xf32>
    %c0_77 = arith.constant 0 : index
    %c0_78 = arith.constant 0 : index
    %78 = vector.load %arg10[%c0_77, %c0_78] : memref<4x128xf32, #tpu.memory_space<vmem>>, vector<2x128xf32>
    tpu.vector_store %arg10[%c0_77, %c0_78], %77 {strides = array<i32>} : memref<4x128xf32, #tpu.memory_space<vmem>>, vector<2x128xf32>,
    %c2_79 = arith.constant 2 : index
    %c0_80 = arith.constant 0 : index
    %79 = vector.load %arg10[%c2_79, %c0_80] : memref<4x128xf32, #tpu.memory_space<vmem>>, vector<2x128xf32>
    %c9 = arith.constant 9 : index
    %c0_81 = arith.constant 0 : index
    %80 = vector.load %arg9[%c9, %c0_81] : memref<12x128xf32, #tpu.memory_space<vmem>>, vector<2x128xf32>
    %cst_82 = arith.constant dense<0.000000e+00> : vector<2x128xf32>
    %81 = tpu.matmul %80, %73, %cst_82 {dimension_numbers = #tpu.dot_dimension_numbers<[1], [0], [0], [1], [0, 0, 1, 1], [], []>} : vector<2x128xf32>, vector<128x128xf32>, vector<2x128xf32> -> vector<2x128xf32>
    %82 = arith.addf %79, %81 : vector<2x128xf32>
    %c2_83 = arith.constant 2 : index
    %c0_84 = arith.constant 0 : index
    %83 = vector.load %arg10[%c2_83, %c0_84] : memref<4x128xf32, #tpu.memory_space<vmem>>, vector<2x128xf32>
    tpu.vector_store %arg10[%c2_83, %c0_84], %82 {strides = array<i32>} : memref<4x128xf32, #tpu.memory_space<vmem>>, vector<2x128xf32>,
    %c512 = arith.constant 512 : index
    %c0_85 = arith.constant 0 : index
    %84 = vector.load %arg4[%c512, %c0_85] : memref<640x128xf32, #tpu.memory_space<vmem>>, vector<128x128xf32>
    %c0_86 = arith.constant 0 : index
    %c0_87 = arith.constant 0 : index
    %85 = vector.load %arg10[%c0_86, %c0_87] : memref<4x128xf32, #tpu.memory_space<vmem>>, vector<2x128xf32>
    %c4 = arith.constant 4 : index
    %c0_88 = arith.constant 0 : index
    %86 = vector.load %arg9[%c4, %c0_88] : memref<12x128xf32, #tpu.memory_space<vmem>>, vector<2x128xf32>
    %cst_89 = arith.constant dense<0.000000e+00> : vector<2x128xf32>
    %87 = tpu.matmul %86, %84, %cst_89 {dimension_numbers = #tpu.dot_dimension_numbers<[1], [0], [0], [1], [0, 0, 1, 1], [], []>} : vector<2x128xf32>, vector<128x128xf32>, vector<2x128xf32> -> vector<2x128xf32>
    %88 = arith.addf %85, %87 : vector<2x128xf32>
    %c0_90 = arith.constant 0 : index
    %c0_91 = arith.constant 0 : index
    %89 = vector.load %arg10[%c0_90, %c0_91] : memref<4x128xf32, #tpu.memory_space<vmem>>, vector<2x128xf32>
    tpu.vector_store %arg10[%c0_90, %c0_91], %88 {strides = array<i32>} : memref<4x128xf32, #tpu.memory_space<vmem>>, vector<2x128xf32>,
    %c2_92 = arith.constant 2 : index
    %c0_93 = arith.constant 0 : index
    %90 = vector.load %arg10[%c2_92, %c0_93] : memref<4x128xf32, #tpu.memory_space<vmem>>, vector<2x128xf32>
    %c10 = arith.constant 10 : index
    %c0_94 = arith.constant 0 : index
    %91 = vector.load %arg9[%c10, %c0_94] : memref<12x128xf32, #tpu.memory_space<vmem>>, vector<2x128xf32>
    %cst_95 = arith.constant dense<0.000000e+00> : vector<2x128xf32>
    %92 = tpu.matmul %91, %84, %cst_95 {dimension_numbers = #tpu.dot_dimension_numbers<[1], [0], [0], [1], [0, 0, 1, 1], [], []>} : vector<2x128xf32>, vector<128x128xf32>, vector<2x128xf32> -> vector<2x128xf32>
    %93 = arith.addf %90, %92 : vector<2x128xf32>
    %c2_96 = arith.constant 2 : index
    %c0_97 = arith.constant 0 : index
    %94 = vector.load %arg10[%c2_96, %c0_97] : memref<4x128xf32, #tpu.memory_space<vmem>>, vector<2x128xf32>
    tpu.vector_store %arg10[%c2_96, %c0_97], %93 {strides = array<i32>} : memref<4x128xf32, #tpu.memory_space<vmem>>, vector<2x128xf32>,
    %c0_98 = arith.constant 0 : index
    %c0_99 = arith.constant 0 : index
    %95 = vector.load %arg10[%c0_98, %c0_99] : memref<4x128xf32, #tpu.memory_space<vmem>>, vector<4x128xf32>
    %cst_100 = arith.constant dense<0.000000e+00> : vector<128xf32>
    %96 = vector.multi_reduction <add>, %95, %cst_100 [0] : vector<4x128xf32> to vector<128xf32>
    %97 = vector.shape_cast %96 : vector<128xf32> to vector<1x128xf32>
    %98 = arith.mulf %95, %95 : vector<4x128xf32>
    %cst_101 = arith.constant dense<0.000000e+00> : vector<128xf32>
    %99 = vector.multi_reduction <add>, %98, %cst_101 [0] : vector<4x128xf32> to vector<128xf32>
    %100 = vector.shape_cast %99 : vector<128xf32> to vector<1x128xf32>
    %cst_102 = arith.constant 2.500000e-01 : f32
    %101 = vector.broadcast %cst_102 : f32 to vector<1x128xf32>
    %102 = arith.mulf %97, %101 : vector<1x128xf32>
    %cst_103 = arith.constant 2.500000e-01 : f32
    %103 = vector.broadcast %cst_103 : f32 to vector<1x128xf32>
    %104 = arith.mulf %100, %103 : vector<1x128xf32>
    %105 = arith.mulf %102, %102 : vector<1x128xf32>
    %106 = arith.subf %104, %105 : vector<1x128xf32>
    %cst_104 = arith.constant 0.000000e+00 : f32
    %107 = vector.broadcast %cst_104 : f32 to vector<1x128xf32>
    %108 = arith.maximumf %106, %107 : vector<1x128xf32>
    %c0_105 = arith.constant 0 : index
    %c0_106 = arith.constant 0 : index
    %109 = vector.load %arg5[%c0_105, %c0_106] : memref<1x128xf32, #tpu.memory_space<vmem>>, vector<1x128xf32>
    %cst_107 = arith.constant 9.99999974E-6 : f32
    %110 = vector.broadcast %cst_107 : f32 to vector<1x128xf32>
    %111 = arith.addf %108, %110 : vector<1x128xf32>
    %112 = math.rsqrt %111 : vector<1x128xf32>
    %113 = arith.mulf %109, %112 : vector<1x128xf32>
    %c0_108 = arith.constant 0 : index
    %c0_109 = arith.constant 0 : index
    %114 = vector.load %arg6[%c0_108, %c0_109] : memref<1x128xf32, #tpu.memory_space<vmem>>, vector<1x128xf32>
    %115 = arith.mulf %102, %113 : vector<1x128xf32>
    %116 = arith.subf %114, %115 : vector<1x128xf32>
    %c0_110 = arith.constant 0 : index
    %c0_111 = arith.constant 0 : index
    %117 = vector.load %arg10[%c0_110, %c0_111] : memref<4x128xf32, #tpu.memory_space<vmem>>, vector<4x128xf32>
    %118 = vector.broadcast %113 : vector<1x128xf32> to vector<4x128xf32>
    %119 = arith.mulf %117, %118 : vector<4x128xf32>
    %120 = vector.broadcast %116 : vector<1x128xf32> to vector<4x128xf32>
    %121 = arith.addf %119, %120 : vector<4x128xf32>
    %cst_112 = arith.constant 0.000000e+00 : f32
    %122 = vector.broadcast %cst_112 : f32 to vector<4x128xf32>
    %123 = arith.maximumf %121, %122 : vector<4x128xf32>
    %c0_113 = arith.constant 0 : index
    %c0_114 = arith.constant 0 : index
    %124 = vector.load %arg10[%c0_113, %c0_114] : memref<4x128xf32, #tpu.memory_space<vmem>>, vector<4x128xf32>
    tpu.vector_store %arg10[%c0_113, %c0_114], %123 {strides = array<i32>} : memref<4x128xf32, #tpu.memory_space<vmem>>, vector<4x128xf32>,
    %c0_115 = arith.constant 0 : index
    %c0_116 = arith.constant 0 : index
    %125 = tpu.strided_load %arg10[%c0_115, %c0_116] {strides = array<i32: 2, 1>} : memref<4x128xf32, #tpu.memory_space<vmem>>, vector<2x128xf32>
    %c1_117 = arith.constant 1 : index
    %c0_118 = arith.constant 0 : index
    %126 = tpu.strided_load %arg10[%c1_117, %c0_118] {strides = array<i32: 2, 1>} : memref<4x128xf32, #tpu.memory_space<vmem>>, vector<2x128xf32>
    %127 = arith.maximumf %125, %126 : vector<2x128xf32>
    %c0_119 = arith.constant 0 : index
    %c0_120 = arith.constant 0 : index
    %128 = vector.load %arg7[%c0_119, %c0_120] : memref<2x128xf32, #tpu.memory_space<vmem>>, vector<2x128xf32>
    tpu.vector_store %arg7[%c0_119, %c0_120], %127 {strides = array<i32>} : memref<2x128xf32, #tpu.memory_space<vmem>>, vector<2x128xf32>,
    return
  }
}

</mosaic_0001>

<llo_original>
// kernel: temporal_conv_forward.1
$region0: #{temporal_conv_forward.1}
  #allocation0 [shape = 'u32[]', space=smem, size = 0x4, offset = 0x4, fixed_abs, tag = 'smem constant byte address 0x4 - core index']
  #allocation1 [shape = 'u32[144,128]{1,0:T(1,128)}', space=vmem, size = 0x12000, scoped, tag = 'internal scratch']
  #allocation2 [shape = 'f32[24,128]{1,0:T(8,128)}', space=vmem, size = 0x3000, scoped, tag = 'scratch operand']
  #allocation3 [shape = 'f32[12,128]{1,0:T(8,128)}', space=vmem, size = 0x2000, scoped, tag = 'scratch operand']
  #allocation4 [shape = 'f32[4,128]{1,0:T(4,128)}', space=vmem, size = 0x800, scoped, tag = 'scratch operand']
  %s0 = inlined_call_operand.vmem [shape: f32[24,128], index: 0, kind: input, shape index: {}]
  %s1 = inlined_call_operand.vmem [shape: f32[128,128], index: 1, kind: input, shape index: {}]
  %s2 = inlined_call_operand.vmem [shape: f32[1,128], index: 2, kind: input, shape index: {}]
  %s3 = inlined_call_operand.vmem [shape: f32[1,128], index: 3, kind: input, shape index: {}]
  %s4 = inlined_call_operand.vmem [shape: f32[640,128], index: 4, kind: input, shape index: {}]
  %s5 = inlined_call_operand.vmem [shape: f32[1,128], index: 5, kind: input, shape index: {}]
  %s6 = inlined_call_operand.vmem [shape: f32[1,128], index: 6, kind: input, shape index: {}]
  %s7 = inlined_call_operand.hbm [shape: f32[2,128], index: 7, kind: output, shape index: {}]
  %s8 = sld [smem:[#allocation0]]
  $region38: #{temporal_conv_forward.1} parent=0
    _
  %s10 = ssub.s32 1, %s8
  %s11 = scalar_select 0, %s10, %s8
  $region1: #{temporal_conv_forward.1} parent=0
    #allocation5 [shape = 'u8[1024]{0}', space=vmem, size = 0x400, scoped, tag = 'output window, operand 0, single buffered']
    #allocation6 [shape = 's32[1]{0}', space=sflag, size = 0x4, scoped, tag = 'scoped memory for temporal_conv_forward.1']
    %12 = vsyncpa [#allocation6], 0
    // Predicated region
    $region2: #{temporal_conv_forward.1} parent=1 // pred_check
      _
    $region3: #{temporal_conv_forward.1} parent=1 // pred_check_branch
      %14 = sbr.rel (0) target = $region5
    $region4: #{temporal_conv_forward.1} parent=1 // pred_region
      _
    $region5: #{temporal_conv_forward.1} parent=1 // pred_fallthru
      _
    // Predicated region
    $region6: #{temporal_conv_forward.1} parent=1 // pred_check
      _
    $region7: #{temporal_conv_forward.1} parent=1 // pred_check_branch
      %16 = sbr.rel (0) target = $region9
    $region8: #{temporal_conv_forward.1} parent=1 // pred_region
      _
    $region9: #{temporal_conv_forward.1} parent=1 // pred_fallthru
      _
    // Predicated region
    $region10: #{temporal_conv_forward.1} parent=1 // pred_check
      _
    $region11: #{temporal_conv_forward.1} parent=1 // pred_check_branch
      %18 = sbr.rel (0) target = $region13
    $region12: #{temporal_conv_forward.1} parent=1 // pred_region
      _
    $region13: #{temporal_conv_forward.1} parent=1 // pred_fallthru
      _
    // Predicated region
    $region14: #{temporal_conv_forward.1} parent=1 // pred_check
      _
    $region15: #{temporal_conv_forward.1} parent=1 // pred_check_branch
      %20 = sbr.rel (0) target = $region17
    $region16: #{temporal_conv_forward.1} parent=1 // pred_region
      _
    $region17: #{temporal_conv_forward.1} parent=1 // pred_fallthru
      _
    // Predicated region
    $region18: #{temporal_conv_forward.1} parent=1 // pred_check
      _
    $region19: #{temporal_conv_forward.1} parent=1 // pred_check_branch
      %22 = sbr.rel (0) target = $region21
    $region20: #{temporal_conv_forward.1} parent=1 // pred_region
      _
    $region21: #{temporal_conv_forward.1} parent=1 // pred_fallthru
      _
    // Predicated region
    $region22: #{temporal_conv_forward.1} parent=1 // pred_check
      _
    $region23: #{temporal_conv_forward.1} parent=1 // pred_check_branch
      %24 = sbr.rel (0) target = $region25
    $region24: #{temporal_conv_forward.1} parent=1 // pred_region
      _
    $region25: #{temporal_conv_forward.1} parent=1 // pred_fallthru
      _
    // Predicated region
    $region26: #{temporal_conv_forward.1} parent=1 // pred_check
      _
    $region27: #{temporal_conv_forward.1} parent=1 // pred_check_branch
      %26 = sbr.rel (0) target = $region29
    $region28: #{temporal_conv_forward.1} parent=1 // pred_region
      _
    $region29: #{temporal_conv_forward.1} parent=1 // pred_fallthru
      _
    %v27 = vld [vmem:[%s0] sm:$0xff]
    %v28 = vld [vmem:[%s0 + $0x8] sm:$0xff]
    %v29 = vld [vmem:[%s0 + $0x10] sm:$0xff]
    %v30 = vld [vmem:[%s1] sm:$0xff]
    %v31 = vld [vmem:[%s1 + $0x8] sm:$0xff]
    %v32 = vld [vmem:[%s1 + $0x10] sm:$0xff]
    %v33 = vld [vmem:[%s1 + $0x18] sm:$0xff]
    %v34 = vld [vmem:[%s1 + $0x20] sm:$0xff]
    %v35 = vld [vmem:[%s1 + $0x28] sm:$0xff]
    %v36 = vld [vmem:[%s1 + $0x30] sm:$0xff]
    %v37 = vld [vmem:[%s1 + $0x38] sm:$0xff]
    %v38 = vld [vmem:[%s1 + $0x40] sm:$0xff]
    %v39 = vld [vmem:[%s1 + $0x48] sm:$0xff]
    %v40 = vld [vmem:[%s1 + $0x50] sm:$0xff]
    %v41 = vld [vmem:[%s1 + $0x58] sm:$0xff]
    %v42 = vld [vmem:[%s1 + $0x60] sm:$0xff]
    %v43 = vld [vmem:[%s1 + $0x68] sm:$0xff]
    %v44 = vld [vmem:[%s1 + $0x70] sm:$0xff]
    %v45 = vld [vmem:[%s1 + $0x78] sm:$0xff]
    %46 = vmatprep.subr.mxu0 0.0
    %47 = vmatpush1.msra.mxu0 %v30
    %48 = vmatprep.subr.mxu0 0.0
    %49 = vmatpush1.msra.mxu0 %v31
    %50 = vmatprep.subr.mxu0 0.0
    %51 = vmatpush1.msra.mxu0 %v32
    %52 = vmatprep.subr.mxu0 0.0
    %53 = vmatpush1.msra.mxu0 %v33
    %54 = vmatprep.subr.mxu0 0.0
    %55 = vmatpush1.msra.mxu0 %v34
    %56 = vmatprep.subr.mxu0 0.0
    %57 = vmatpush1.msra.mxu0 %v35
    %58 = vmatprep.subr.mxu0 0.0
    %59 = vmatpush1.msra.mxu0 %v36
    %60 = vmatprep.subr.mxu0 0.0
    %61 = vmatpush1.msra.mxu0 %v37
    %62 = vmatprep.subr.mxu0 0.0
    %63 = vmatpush1.msra.mxu0 %v38
    %64 = vmatprep.subr.mxu0 0.0
    %65 = vmatpush1.msra.mxu0 %v39
    %66 = vmatprep.subr.mxu0 0.0
    %67 = vmatpush1.msra.mxu0 %v40
    %68 = vmatprep.subr.mxu0 0.0
    %69 = vmatpush1.msra.mxu0 %v41
    %70 = vmatprep.subr.mxu0 0.0
    %71 = vmatpush1.msra.mxu0 %v42
    %72 = vmatprep.subr.mxu0 0.0
    %73 = vmatpush1.msra.mxu0 %v43
    %74 = vmatprep.subr.mxu0 0.0
    %75 = vmatpush1.msra.mxu0 %v44
    %76 = vmatprep.subr.mxu0 0.0
    %77 = vmatpush1.msra.mxu0 %v45
    %78 = vmatprep.subr.mxu0 0.0
    %79 = vmatpush1.msra.mxu0 0.0
    %80 = vmatprep.subr.mxu0 0.0
    %81 = vmatpush1.msra.mxu0 0.0
    %82 = vmatprep.subr.mxu0 0.0
    %83 = vmatpush1.msra.mxu0 0.0
    %84 = vmatprep.subr.mxu0 0.0
    %85 = vmatpush1.msra.mxu0 0.0
    %86 = vmatprep.subr.mxu0 0.0
    %87 = vmatpush1.msra.mxu0 0.0
    %88 = vmatprep.subr.mxu0 0.0
    %89 = vmatpush1.msra.mxu0 0.0
    %90 = vmatprep.subr.mxu0 0.0
    %91 = vmatpush1.msra.mxu0 0.0
    %92 = vmatprep.subr.mxu0 0.0
    %93 = vmatpush1.msra.mxu0 0.0
    %94 = vmatprep.subr.mxu0 0.0
    %95 = vmatpush1.msra.mxu0 0.0
    %96 = vmatprep.subr.mxu0 0.0
    %97 = vmatpush1.msra.mxu0 0.0
    %98 = vmatprep.subr.mxu0 0.0
    %99 = vmatpush1.msra.mxu0 0.0
    %100 = vmatprep.subr.mxu0 0.0
    %101 = vmatpush1.msra.mxu0 0.0
    %102 = vmatprep.subr.mxu0 0.0
    %103 = vmatpush1.msra.mxu0 0.0
    %104 = vmatprep.subr.mxu0 0.0
    %105 = vmatpush1.msra.mxu0 0.0
    %106 = vmatprep.subr.mxu0 0.0
    %107 = vmatpush1.msra.mxu0 0.0
    %108 = vmatprep.subr.mxu0 0.0
    %109 = vmatpush1.msra.mxu0 0.0
    %110 = vmatprep.mubr.f32.mxu0 0.0
    %111 = vmatmul.mubr.f32.gmra.mrb[0].mxu0 %v27
    %v112 = vpop.f32.mrb[0].mxu0
    %v113 = vadd.f32 0.0, %v112
    %v114 = vpop.f32.mrb[0].mxu0
    %115 = vmatprep.mubr.f32.mxu0 0.0
    %116 = vmatmul.mubr.f32.gmra.mrb[0].mxu0 %v28
    %v117 = vpop.f32.mrb[0].mxu0
    %v118 = vadd.f32 0.0, %v117
    %v119 = vpop.f32.mrb[0].mxu0
    %120 = vmatprep.mubr.f32.mxu0 0.0
    %121 = vmatmul.mubr.f32.gmra.mrb[0].mxu0 %v29
    %v122 = vpop.f32.mrb[0].mxu0
    %v123 = vadd.f32 0.0, %v122
    %v124 = vpop.f32.mrb[0].mxu0
    %125 = vdwg.mxu0
    %126 = vst [vmem:[#allocation2] sm:$0xff] %v113
    %127 = vst [vmem:[#allocation2 + $0x8] sm:$0xff] %v118
    %128 = vst [vmem:[#allocation2 + $0x10] sm:$0xff] %v123
    %v129 = vld [vmem:[#allocation2] sm:$0xff]
    %v130 = vld [vmem:[#allocation2 + $0x8] sm:$0xff]
    %v131 = vld [vmem:[#allocation2 + $0x10] sm:$0xff]
    %v132 = vadd.f32 %v129, %v130
    %v133 = vadd.f32 %v132, %v131
    %v134 = vrot.slane %v133, 4
    %v135 = vadd.f32 %v133, %v134
    %v136 = vrot.slane %v135, 2
    %v137 = vadd.f32 %v135, %v136
    %v138 = vrot.slane %v137, 1
    %v139 = vadd.f32 %v137, %v138
    %v140 = vmul.f32 %v129, %v129
    %v141 = vmul.f32 %v130, %v130
    %v142 = vmul.f32 %v131, %v131
    %v143 = vadd.f32 %v140, %v141
    %v144 = vadd.f32 %v143, %v142
    %v145 = vrot.slane %v144, 4
    %v146 = vadd.f32 %v144, %v145
    %v147 = vrot.slane %v146, 2
    %v148 = vadd.f32 %v146, %v147
    %v149 = vrot.slane %v148, 1
    %v150 = vadd.f32 %v148, %v149
    %v151 = vmul.f32 %v139, 0.041666668
    %v152 = vmul.f32 %v150, 0.041666668
    %v153 = vmul.f32 %v151, %v151
    %v154 = vsub.f32 %v152, %v153
    %v155 = vmax.f32 %v154, 0.0
    %v156 = vld [vmem:[%s2] sm:$0x1]
    %v157 = vadd.f32 %v155, 1e-05
    %v158 = vrsqrt.pop %v157
    %v159 = vmul.f32 %v156, %v158
    %v160 = vld [vmem:[%s3] sm:$0x1]
    %v161 = vmul.f32 %v151, %v159
    %v162 = vsub.f32 %v160, %v161
    %v164 = vlaneseq
    %v165 = vshrl.u32 %v164, 7
    %v166 = vsub.s32 0, %v165
    %v167 = vrot.slane %v159, %v166
    %v169 = vmul.f32 %v129, %v167
    %v170 = vmul.f32 %v130, %v167
    %v171 = vmul.f32 %v131, %v167
    %v173 = vlaneseq
    %v174 = vshrl.u32 %v173, 7
    %v175 = vsub.s32 0, %v174
    %v176 = vrot.slane %v162, %v175
    %v178 = vadd.f32 %v169, %v176
    %v179 = vadd.f32 %v170, %v176
    %v180 = vadd.f32 %v171, %v176
    %v181 = vmax.f32 %v178, 0.0
    %v182 = vmax.f32 %v179, 0.0
    %v183 = vmax.f32 %v180, 0.0
    %184 = vst [vmem:[#allocation2] sm:$0xff] %v181
    %185 = vst [vmem:[#allocation2 + $0x8] sm:$0xff] %v182
    %186 = vst [vmem:[#allocation2 + $0x10] sm:$0xff] %v183
    %v187 = vld [vmem:[#allocation2] ss:$2 sm:$0xff]
    %s188 = scalar_lea.vmem [#allocation2], 16
    %v189 = vld [vmem:[%s188] ss:$2 sm:$0xf]
    %s190 = scalar_lea.vmem [#allocation2], 1
    %v191 = vld [vmem:[%s190] ss:$2 sm:$0xff]
    %s192 = scalar_lea.vmem [#allocation2], 17
    %v193 = vld [vmem:[%s192] ss:$2 sm:$0xf]
    %v194 = vmax.f32 %v187, %v191
    %v195 = vmax.f32 %v189, %v193
    %196 = vst [vmem:[#allocation3] sm:$0xff] %v194
    %197 = vst [vmem:[#allocation3 + $0x8] sm:$0xf] %v195
    %198 = vst [vmem:[#allocation4] sm:$0xf] 0.0
    %v199 = vld [vmem:[%s4] sm:$0xff]
    %v200 = vld [vmem:[%s4 + $0x8] sm:$0xff]
    %v201 = vld [vmem:[%s4 + $0x10] sm:$0xff]
    %v202 = vld [vmem:[%s4 + $0x18] sm:$0xff]
    %v203 = vld [vmem:[%s4 + $0x20] sm:$0xff]
    %v204 = vld [vmem:[%s4 + $0x28] sm:$0xff]
    %v205 = vld [vmem:[%s4 + $0x30] sm:$0xff]
    %v206 = vld [vmem:[%s4 + $0x38] sm:$0xff]
    %v207 = vld [vmem:[%s4 + $0x40] sm:$0xff]
    %v208 = vld [vmem:[%s4 + $0x48] sm:$0xff]
    %v209 = vld [vmem:[%s4 + $0x50] sm:$0xff]
    %v210 = vld [vmem:[%s4 + $0x58] sm:$0xff]
    %v211 = vld [vmem:[%s4 + $0x60] sm:$0xff]
    %v212 = vld [vmem:[%s4 + $0x68] sm:$0xff]
    %v213 = vld [vmem:[%s4 + $0x70] sm:$0xff]
    %v214 = vld [vmem:[%s4 + $0x78] sm:$0xff]
    %v215 = vld [vmem:[#allocation4] sm:$0x3]
    %v216 = vld [vmem:[#allocation3] sm:$0x3]
    %217 = vmatprep.subr.mxu0 0.0
    %218 = vmatpush1.msra.mxu0 %v199
    %219 = vmatprep.subr.mxu0 0.0
    %220 = vmatpush1.msra.mxu0 %v200
    %221 = vmatprep.subr.mxu0 0.0
    %222 = vmatpush1.msra.mxu0 %v201
    %223 = vmatprep.subr.mxu0 0.0
    %224 = vmatpush1.msra.mxu0 %v202
    %225 = vmatprep.subr.mxu0 0.0
    %226 = vmatpush1.msra.mxu0 %v203
    %227 = vmatprep.subr.mxu0 0.0
    %228 = vmatpush1.msra.mxu0 %v204
    %229 = vmatprep.subr.mxu0 0.0
    %230 = vmatpush1.msra.mxu0 %v205
    %231 = vmatprep.subr.mxu0 0.0
    %232 = vmatpush1.msra.mxu0 %v206
    %233 = vmatprep.subr.mxu0 0.0
    %234 = vmatpush1.msra.mxu0 %v207
    %235 = vmatprep.subr.mxu0 0.0
    %236 = vmatpush1.msra.mxu0 %v208
    %237 = vmatprep.subr.mxu0 0.0
    %238 = vmatpush1.msra.mxu0 %v209
    %239 = vmatprep.subr.mxu0 0.0
    %240 = vmatpush1.msra.mxu0 %v210
    %241 = vmatprep.subr.mxu0 0.0
    %242 = vmatpush1.msra.mxu0 %v211
    %243 = vmatprep.subr.mxu0 0.0
    %244 = vmatpush1.msra.mxu0 %v212
    %245 = vmatprep.subr.mxu0 0.0
    %246 = vmatpush1.msra.mxu0 %v213
    %247 = vmatprep.subr.mxu0 0.0
    %248 = vmatpush1.msra.mxu0 %v214
    %249 = vmatprep.subr.mxu0 0.0
    %250 = vmatpush1.msra.mxu0 0.0
    %251 = vmatprep.subr.mxu0 0.0
    %252 = vmatpush1.msra.mxu0 0.0
    %253 = vmatprep.subr.mxu0 0.0
    %254 = vmatpush1.msra.mxu0 0.0
    %255 = vmatprep.subr.mxu0 0.0
    %256 = vmatpush1.msra.mxu0 0.0
    %257 = vmatprep.subr.mxu0 0.0
    %258 = vmatpush1.msra.mxu0 0.0
    %259 = vmatprep.subr.mxu0 0.0
    %260 = vmatpush1.msra.mxu0 0.0
    %261 = vmatprep.subr.mxu0 0.0
    %262 = vmatpush1.msra.mxu0 0.0
    %263 = vmatprep.subr.mxu0 0.0
    %264 = vmatpush1.msra.mxu0 0.0
    %265 = vmatprep.subr.mxu0 0.0
    %266 = vmatpush1.msra.mxu0 0.0
    %267 = vmatprep.subr.mxu0 0.0
    %268 = vmatpush1.msra.mxu0 0.0
    %269 = vmatprep.subr.mxu0 0.0
    %270 = vmatpush1.msra.mxu0 0.0
    %271 = vmatprep.subr.mxu0 0.0
    %272 = vmatpush1.msra.mxu0 0.0
    %273 = vmatprep.subr.mxu0 0.0
    %274 = vmatpush1.msra.mxu0 0.0
    %275 = vmatprep.subr.mxu0 0.0
    %276 = vmatpush1.msra.mxu0 0.0
    %277 = vmatprep.subr.mxu0 0.0
    %278 = vmatpush1.msra.mxu0 0.0
    %279 = vmatprep.subr.mxu0 0.0
    %280 = vmatpush1.msra.mxu0 0.0
    %281 = vmatprep.mubr.f32.mxu0 0.0
    %282 = vmatmul.mubr.f32.gmra.mrb[0].mxu0 %v216
    %v283 = vpop.f32.mrb[0].mxu0
    %v284 = vadd.f32 0.0, %v283
    %v285 = vpop.f32.mrb[0].mxu0
    %286 = vdwg.mxu0
    %v287 = vadd.f32 %v215, %v284
    %288 = vst [vmem:[#allocation4] sm:$0x3] %v287
    %v289 = vld [vmem:[#allocation4 + $0x2] sm:$0x3]
    %v290 = vld [vmem:[#allocation3 + $0x6] sm:$0x3]
    %291 = vmatprep.subr.mxu0 0.0
    %292 = vmatpush1.msra.mxu0 %v199
    %293 = vmatprep.subr.mxu0 0.0
    %294 = vmatpush1.msra.mxu0 %v200
    %295 = vmatprep.subr.mxu0 0.0
    %296 = vmatpush1.msra.mxu0 %v201
    %297 = vmatprep.subr.mxu0 0.0
    %298 = vmatpush1.msra.mxu0 %v202
    %299 = vmatprep.subr.mxu0 0.0
    %300 = vmatpush1.msra.mxu0 %v203
    %301 = vmatprep.subr.mxu0 0.0
    %302 = vmatpush1.msra.mxu0 %v204
    %303 = vmatprep.subr.mxu0 0.0
    %304 = vmatpush1.msra.mxu0 %v205
    %305 = vmatprep.subr.mxu0 0.0
    %306 = vmatpush1.msra.mxu0 %v206
    %307 = vmatprep.subr.mxu0 0.0
    %308 = vmatpush1.msra.mxu0 %v207
    %309 = vmatprep.subr.mxu0 0.0
    %310 = vmatpush1.msra.mxu0 %v208
    %311 = vmatprep.subr.mxu0 0.0
    %312 = vmatpush1.msra.mxu0 %v209
    %313 = vmatprep.subr.mxu0 0.0
    %314 = vmatpush1.msra.mxu0 %v210
    %315 = vmatprep.subr.mxu0 0.0
    %316 = vmatpush1.msra.mxu0 %v211
    %317 = vmatprep.subr.mxu0 0.0
    %318 = vmatpush1.msra.mxu0 %v212
    %319 = vmatprep.subr.mxu0 0.0
    %320 = vmatpush1.msra.mxu0 %v213
    %321 = vmatprep.subr.mxu0 0.0
    %322 = vmatpush1.msra.mxu0 %v214
    %323 = vmatprep.subr.mxu0 0.0
    %324 = vmatpush1.msra.mxu0 0.0
    %325 = vmatprep.subr.mxu0 0.0
    %326 = vmatpush1.msra.mxu0 0.0
    %327 = vmatprep.subr.mxu0 0.0
    %328 = vmatpush1.msra.mxu0 0.0
    %329 = vmatprep.subr.mxu0 0.0
    %330 = vmatpush1.msra.mxu0 0.0
    %331 = vmatprep.subr.mxu0 0.0
    %332 = vmatpush1.msra.mxu0 0.0
    %333 = vmatprep.subr.mxu0 0.0
    %334 = vmatpush1.msra.mxu0 0.0
    %335 = vmatprep.subr.mxu0 0.0
    %336 = vmatpush1.msra.mxu0 0.0
    %337 = vmatprep.subr.mxu0 0.0
    %338 = vmatpush1.msra.mxu0 0.0
    %339 = vmatprep.subr.mxu0 0.0
    %340 = vmatpush1.msra.mxu0 0.0
    %341 = vmatprep.subr.mxu0 0.0
    %342 = vmatpush1.msra.mxu0 0.0
    %343 = vmatprep.subr.mxu0 0.0
    %344 = vmatpush1.msra.mxu0 0.0
    %345 = vmatprep.subr.mxu0 0.0
    %346 = vmatpush1.msra.mxu0 0.0
    %347 = vmatprep.subr.mxu0 0.0
    %348 = vmatpush1.msra.mxu0 0.0
    %349 = vmatprep.subr.mxu0 0.0
    %350 = vmatpush1.msra.mxu0 0.0
    %351 = vmatprep.subr.mxu0 0.0
    %352 = vmatpush1.msra.mxu0 0.0
    %353 = vmatprep.subr.mxu0 0.0
    %354 = vmatpush1.msra.mxu0 0.0
    %355 = vmatprep.mubr.f32.mxu0 0.0
    %356 = vmatmul.mubr.f32.gmra.mrb[0].mxu0 %v290
    %v357 = vpop.f32.mrb[0].mxu0
    %v358 = vadd.f32 0.0, %v357
    %v359 = vpop.f32.mrb[0].mxu0
    %360 = vdwg.mxu0
    %v361 = vadd.f32 %v289, %v358
    %362 = vst [vmem:[#allocation4 + $0x2] sm:$0x3] %v361
    %v363 = vld [vmem:[%s4 + $0x80] sm:$0xff]
    %v364 = vld [vmem:[%s4 + $0x88] sm:$0xff]
    %v365 = vld [vmem:[%s4 + $0x90] sm:$0xff]
    %v366 = vld [vmem:[%s4 + $0x98] sm:$0xff]
    %v367 = vld [vmem:[%s4 + $0xa0] sm:$0xff]
    %v368 = vld [vmem:[%s4 + $0xa8] sm:$0xff]
    %v369 = vld [vmem:[%s4 + $0xb0] sm:$0xff]
    %v370 = vld [vmem:[%s4 + $0xb8] sm:$0xff]
    %v371 = vld [vmem:[%s4 + $0xc0] sm:$0xff]
    %v372 = vld [vmem:[%s4 + $0xc8] sm:$0xff]
    %v373 = vld [vmem:[%s4 + $0xd0] sm:$0xff]
    %v374 = vld [vmem:[%s4 + $0xd8] sm:$0xff]
    %v375 = vld [vmem:[%s4 + $0xe0] sm:$0xff]
    %v376 = vld [vmem:[%s4 + $0xe8] sm:$0xff]
    %v377 = vld [vmem:[%s4 + $0xf0] sm:$0xff]
    %v378 = vld [vmem:[%s4 + $0xf8] sm:$0xff]
    %v379 = vld [vmem:[#allocation4] sm:$0x3]
    %v380 = vld [vmem:[#allocation3 + $0x1] sm:$0x3]
    %381 = vmatprep.subr.mxu0 0.0
    %382 = vmatpush1.msra.mxu0 %v363
    %383 = vmatprep.subr.mxu0 0.0
    %384 = vmatpush1.msra.mxu0 %v364
    %385 = vmatprep.subr.mxu0 0.0
    %386 = vmatpush1.msra.mxu0 %v365
    %387 = vmatprep.subr.mxu0 0.0
    %388 = vmatpush1.msra.mxu0 %v366
    %389 = vmatprep.subr.mxu0 0.0
    %390 = vmatpush1.msra.mxu0 %v367
    %391 = vmatprep.subr.mxu0 0.0
    %392 = vmatpush1.msra.mxu0 %v368
    %393 = vmatprep.subr.mxu0 0.0
    %394 = vmatpush1.msra.mxu0 %v369
    %395 = vmatprep.subr.mxu0 0.0
    %396 = vmatpush1.msra.mxu0 %v370
    %397 = vmatprep.subr.mxu0 0.0
    %398 = vmatpush1.msra.mxu0 %v371
    %399 = vmatprep.subr.mxu0 0.0
    %400 = vmatpush1.msra.mxu0 %v372
    %401 = vmatprep.subr.mxu0 0.0
    %402 = vmatpush1.msra.mxu0 %v373
    %403 = vmatprep.subr.mxu0 0.0
    %404 = vmatpush1.msra.mxu0 %v374
    %405 = vmatprep.subr.mxu0 0.0
    %406 = vmatpush1.msra.mxu0 %v375
    %407 = vmatprep.subr.mxu0 0.0
    %408 = vmatpush1.msra.mxu0 %v376
    %409 = vmatprep.subr.mxu0 0.0
    %410 = vmatpush1.msra.mxu0 %v377
    %411 = vmatprep.subr.mxu0 0.0
    %412 = vmatpush1.msra.mxu0 %v378
    %413 = vmatprep.subr.mxu0 0.0
    %414 = vmatpush1.msra.mxu0 0.0
    %415 = vmatprep.subr.mxu0 0.0
    %416 = vmatpush1.msra.mxu0 0.0
    %417 = vmatprep.subr.mxu0 0.0
    %418 = vmatpush1.msra.mxu0 0.0
    %419 = vmatprep.subr.mxu0 0.0
    %420 = vmatpush1.msra.mxu0 0.0
    %421 = vmatprep.subr.mxu0 0.0
    %422 = vmatpush1.msra.mxu0 0.0
    %423 = vmatprep.subr.mxu0 0.0
    %424 = vmatpush1.msra.mxu0 0.0
    %425 = vmatprep.subr.mxu0 0.0
    %426 = vmatpush1.msra.mxu0 0.0
    %427 = vmatprep.subr.mxu0 0.0
    %428 = vmatpush1.msra.mxu0 0.0
    %429 = vmatprep.subr.mxu0 0.0
    %430 = vmatpush1.msra.mxu0 0.0
    %431 = vmatprep.subr.mxu0 0.0
    %432 = vmatpush1.msra.mxu0 0.0
    %433 = vmatprep.subr.mxu0 0.0
    %434 = vmatpush1.msra.mxu0 0.0
    %435 = vmatprep.subr.mxu0 0.0
    %436 = vmatpush1.msra.mxu0 0.0
    %437 = vmatprep.subr.mxu0 0.0
    %438 = vmatpush1.msra.mxu0 0.0
    %439 = vmatprep.subr.mxu0 0.0
    %440 = vmatpush1.msra.mxu0 0.0
    %441 = vmatprep.subr.mxu0 0.0
    %442 = vmatpush1.msra.mxu0 0.0
    %443 = vmatprep.subr.mxu0 0.0
    %444 = vmatpush1.msra.mxu0 0.0
    %445 = vmatprep.mubr.f32.mxu0 0.0
    %446 = vmatmul.mubr.f32.gmra.mrb[0].mxu0 %v380
    %v447 = vpop.f32.mrb[0].mxu0
    %v448 = vadd.f32 0.0, %v447
    %v449 = vpop.f32.mrb[0].mxu0
    %450 = vdwg.mxu0
    %v451 = vadd.f32 %v379, %v448
    %452 = vst [vmem:[#allocation4] sm:$0x3] %v451
    %v453 = vld [vmem:[#allocation4 + $0x2] sm:$0x3]
    %v454 = vld [vmem:[#allocation3 + $0x7] sm:$0x3]
    %455 = vmatprep.subr.mxu0 0.0
    %456 = vmatpush1.msra.mxu0 %v363
    %457 = vmatprep.subr.mxu0 0.0
    %458 = vmatpush1.msra.mxu0 %v364
    %459 = vmatprep.subr.mxu0 0.0
    %460 = vmatpush1.msra.mxu0 %v365
    %461 = vmatprep.subr.mxu0 0.0
    %462 = vmatpush1.msra.mxu0 %v366
    %463 = vmatprep.subr.mxu0 0.0
    %464 = vmatpush1.msra.mxu0 %v367
    %465 = vmatprep.subr.mxu0 0.0
    %466 = vmatpush1.msra.mxu0 %v368
    %467 = vmatprep.subr.mxu0 0.0
    %468 = vmatpush1.msra.mxu0 %v369
    %469 = vmatprep.subr.mxu0 0.0
    %470 = vmatpush1.msra.mxu0 %v370
    %471 = vmatprep.subr.mxu0 0.0
    %472 = vmatpush1.msra.mxu0 %v371
    %473 = vmatprep.subr.mxu0 0.0
    %474 = vmatpush1.msra.mxu0 %v372
    %475 = vmatprep.subr.mxu0 0.0
    %476 = vmatpush1.msra.mxu0 %v373
    %477 = vmatprep.subr.mxu0 0.0
    %478 = vmatpush1.msra.mxu0 %v374
    %479 = vmatprep.subr.mxu0 0.0
    %480 = vmatpush1.msra.mxu0 %v375
    %481 = vmatprep.subr.mxu0 0.0
    %482 = vmatpush1.msra.mxu0 %v376
    %483 = vmatprep.subr.mxu0 0.0
    %484 = vmatpush1.msra.mxu0 %v377
    %485 = vmatprep.subr.mxu0 0.0
    %486 = vmatpush1.msra.mxu0 %v378
    %487 = vmatprep.subr.mxu0 0.0
    %488 = vmatpush1.msra.mxu0 0.0
    %489 = vmatprep.subr.mxu0 0.0
    %490 = vmatpush1.msra.mxu0 0.0
    %491 = vmatprep.subr.mxu0 0.0
    %492 = vmatpush1.msra.mxu0 0.0
    %493 = vmatprep.subr.mxu0 0.0
    %494 = vmatpush1.msra.mxu0 0.0
    %495 = vmatprep.subr.mxu0 0.0
    %496 = vmatpush1.msra.mxu0 0.0
    %497 = vmatprep.subr.mxu0 0.0
    %498 = vmatpush1.msra.mxu0 0.0
    %499 = vmatprep.subr.mxu0 0.0
    %500 = vmatpush1.msra.mxu0 0.0
    %501 = vmatprep.subr.mxu0 0.0
    %502 = vmatpush1.msra.mxu0 0.0
    %503 = vmatprep.subr.mxu0 0.0
    %504 = vmatpush1.msra.mxu0 0.0
    %505 = vmatprep.subr.mxu0 0.0
    %506 = vmatpush1.msra.mxu0 0.0
    %507 = vmatprep.subr.mxu0 0.0
    %508 = vmatpush1.msra.mxu0 0.0
    %509 = vmatprep.subr.mxu0 0.0
    %510 = vmatpush1.msra.mxu0 0.0
    %511 = vmatprep.subr.mxu0 0.0
    %512 = vmatpush1.msra.mxu0 0.0
    %513 = vmatprep.subr.mxu0 0.0
    %514 = vmatpush1.msra.mxu0 0.0
    %515 = vmatprep.subr.mxu0 0.0
    %516 = vmatpush1.msra.mxu0 0.0
    %517 = vmatprep.subr.mxu0 0.0
    %518 = vmatpush1.msra.mxu0 0.0
    %519 = vmatprep.mubr.f32.mxu0 0.0
    %520 = vmatmul.mubr.f32.gmra.mrb[0].mxu0 %v454
    %v521 = vpop.f32.mrb[0].mxu0
    %v522 = vadd.f32 0.0, %v521
    %v523 = vpop.f32.mrb[0].mxu0
    %524 = vdwg.mxu0
    %v525 = vadd.f32 %v453, %v522
    %526 = vst [vmem:[#allocation4 + $0x2] sm:$0x3] %v525
    %v527 = vld [vmem:[%s4 + $0x100] sm:$0xff]
    %v528 = vld [vmem:[%s4 + $0x108] sm:$0xff]
    %v529 = vld [vmem:[%s4 + $0x110] sm:$0xff]
    %v530 = vld [vmem:[%s4 + $0x118] sm:$0xff]
    %v531 = vld [vmem:[%s4 + $0x120] sm:$0xff]
    %v532 = vld [vmem:[%s4 + $0x128] sm:$0xff]
    %v533 = vld [vmem:[%s4 + $0x130] sm:$0xff]
    %v534 = vld [vmem:[%s4 + $0x138] sm:$0xff]
    %v535 = vld [vmem:[%s4 + $0x140] sm:$0xff]
    %v536 = vld [vmem:[%s4 + $0x148] sm:$0xff]
    %v537 = vld [vmem:[%s4 + $0x150] sm:$0xff]
    %v538 = vld [vmem:[%s4 + $0x158] sm:$0xff]
    %v539 = vld [vmem:[%s4 + $0x160] sm:$0xff]
    %v540 = vld [vmem:[%s4 + $0x168] sm:$0xff]
    %v541 = vld [vmem:[%s4 + $0x170] sm:$0xff]
    %v542 = vld [vmem:[%s4 + $0x178] sm:$0xff]
    %v543 = vld [vmem:[#allocation4] sm:$0x3]
    %v544 = vld [vmem:[#allocation3 + $0x2] sm:$0x3]
    %545 = vmatprep.subr.mxu0 0.0
    %546 = vmatpush1.msra.mxu0 %v527
    %547 = vmatprep.subr.mxu0 0.0
    %548 = vmatpush1.msra.mxu0 %v528
    %549 = vmatprep.subr.mxu0 0.0
    %550 = vmatpush1.msra.mxu0 %v529
    %551 = vmatprep.subr.mxu0 0.0
    %552 = vmatpush1.msra.mxu0 %v530
    %553 = vmatprep.subr.mxu0 0.0
    %554 = vmatpush1.msra.mxu0 %v531
    %555 = vmatprep.subr.mxu0 0.0
    %556 = vmatpush1.msra.mxu0 %v532
    %557 = vmatprep.subr.mxu0 0.0
    %558 = vmatpush1.msra.mxu0 %v533
    %559 = vmatprep.subr.mxu0 0.0
    %560 = vmatpush1.msra.mxu0 %v534
    %561 = vmatprep.subr.mxu0 0.0
    %562 = vmatpush1.msra.mxu0 %v535
    %563 = vmatprep.subr.mxu0 0.0
    %564 = vmatpush1.msra.mxu0 %v536
    %565 = vmatprep.subr.mxu0 0.0
    %566 = vmatpush1.msra.mxu0 %v537
    %567 = vmatprep.subr.mxu0 0.0
    %568 = vmatpush1.msra.mxu0 %v538
    %569 = vmatprep.subr.mxu0 0.0
    %570 = vmatpush1.msra.mxu0 %v539
    %571 = vmatprep.subr.mxu0 0.0
    %572 = vmatpush1.msra.mxu0 %v540
    %573 = vmatprep.subr.mxu0 0.0
    %574 = vmatpush1.msra.mxu0 %v541
    %575 = vmatprep.subr.mxu0 0.0
    %576 = vmatpush1.msra.mxu0 %v542
    %577 = vmatprep.subr.mxu0 0.0
    %578 = vmatpush1.msra.mxu0 0.0
    %579 = vmatprep.subr.mxu0 0.0
    %580 = vmatpush1.msra.mxu0 0.0
    %581 = vmatprep.subr.mxu0 0.0
    %582 = vmatpush1.msra.mxu0 0.0
    %583 = vmatprep.subr.mxu0 0.0
    %584 = vmatpush1.msra.mxu0 0.0
    %585 = vmatprep.subr.mxu0 0.0
    %586 = vmatpush1.msra.mxu0 0.0
    %587 = vmatprep.subr.mxu0 0.0
    %588 = vmatpush1.msra.mxu0 0.0
    %589 = vmatprep.subr.mxu0 0.0
    %590 = vmatpush1.msra.mxu0 0.0
    %591 = vmatprep.subr.mxu0 0.0
    %592 = vmatpush1.msra.mxu0 0.0
    %593 = vmatprep.subr.mxu0 0.0
    %594 = vmatpush1.msra.mxu0 0.0
    %595 = vmatprep.subr.mxu0 0.0
    %596 = vmatpush1.msra.mxu0 0.0
    %597 = vmatprep.subr.mxu0 0.0
    %598 = vmatpush1.msra.mxu0 0.0
    %599 = vmatprep.subr.mxu0 0.0
    %600 = vmatpush1.msra.mxu0 0.0
    %601 = vmatprep.subr.mxu0 0.0
    %602 = vmatpush1.msra.mxu0 0.0
    %603 = vmatprep.subr.mxu0 0.0
    %604 = vmatpush1.msra.mxu0 0.0
    %605 = vmatprep.subr.mxu0 0.0
    %606 = vmatpush1.msra.mxu0 0.0
    %607 = vmatprep.subr.mxu0 0.0
    %608 = vmatpush1.msra.mxu0 0.0
    %609 = vmatprep.mubr.f32.mxu0 0.0
    %610 = vmatmul.mubr.f32.gmra.mrb[0].mxu0 %v544
    %v611 = vpop.f32.mrb[0].mxu0
    %v612 = vadd.f32 0.0, %v611
    %v613 = vpop.f32.mrb[0].mxu0
    %614 = vdwg.mxu0
    %v615 = vadd.f32 %v543, %v612
    %616 = vst [vmem:[#allocation4] sm:$0x3] %v615
    %v617 = vld [vmem:[#allocation4 + $0x2] sm:$0x3]
    %v618 = vld [vmem:[#allocation3 + $0x8] sm:$0x3]
    %619 = vmatprep.subr.mxu0 0.0
    %620 = vmatpush1.msra.mxu0 %v527
    %621 = vmatprep.subr.mxu0 0.0
    %622 = vmatpush1.msra.mxu0 %v528
    %623 = vmatprep.subr.mxu0 0.0
    %624 = vmatpush1.msra.mxu0 %v529
    %625 = vmatprep.subr.mxu0 0.0
    %626 = vmatpush1.msra.mxu0 %v530
    %627 = vmatprep.subr.mxu0 0.0
    %628 = vmatpush1.msra.mxu0 %v531
    %629 = vmatprep.subr.mxu0 0.0
    %630 = vmatpush1.msra.mxu0 %v532
    %631 = vmatprep.subr.mxu0 0.0
    %632 = vmatpush1.msra.mxu0 %v533
    %633 = vmatprep.subr.mxu0 0.0
    %634 = vmatpush1.msra.mxu0 %v534
    %635 = vmatprep.subr.mxu0 0.0
    %636 = vmatpush1.msra.mxu0 %v535
    %637 = vmatprep.subr.mxu0 0.0
    %638 = vmatpush1.msra.mxu0 %v536
    %639 = vmatprep.subr.mxu0 0.0
    %640 = vmatpush1.msra.mxu0 %v537
    %641 = vmatprep.subr.mxu0 0.0
    %642 = vmatpush1.msra.mxu0 %v538
    %643 = vmatprep.subr.mxu0 0.0
    %644 = vmatpush1.msra.mxu0 %v539
    %645 = vmatprep.subr.mxu0 0.0
    %646 = vmatpush1.msra.mxu0 %v540
    %647 = vmatprep.subr.mxu0 0.0
    %648 = vmatpush1.msra.mxu0 %v541
    %649 = vmatprep.subr.mxu0 0.0
    %650 = vmatpush1.msra.mxu0 %v542
    %651 = vmatprep.subr.mxu0 0.0
    %652 = vmatpush1.msra.mxu0 0.0
    %653 = vmatprep.subr.mxu0 0.0
    %654 = vmatpush1.msra.mxu0 0.0
    %655 = vmatprep.subr.mxu0 0.0
    %656 = vmatpush1.msra.mxu0 0.0
    %657 = vmatprep.subr.mxu0 0.0
    %658 = vmatpush1.msra.mxu0 0.0
    %659 = vmatprep.subr.mxu0 0.0
    %660 = vmatpush1.msra.mxu0 0.0
    %661 = vmatprep.subr.mxu0 0.0
    %662 = vmatpush1.msra.mxu0 0.0
    %663 = vmatprep.subr.mxu0 0.0
    %664 = vmatpush1.msra.mxu0 0.0
    %665 = vmatprep.subr.mxu0 0.0
    %666 = vmatpush1.msra.mxu0 0.0
    %667 = vmatprep.subr.mxu0 0.0
    %668 = vmatpush1.msra.mxu0 0.0
    %669 = vmatprep.subr.mxu0 0.0
    %670 = vmatpush1.msra.mxu0 0.0
    %671 = vmatprep.subr.mxu0 0.0
    %672 = vmatpush1.msra.mxu0 0.0
    %673 = vmatprep.subr.mxu0 0.0
    %674 = vmatpush1.msra.mxu0 0.0
    %675 = vmatprep.subr.mxu0 0.0
    %676 = vmatpush1.msra.mxu0 0.0
    %677 = vmatprep.subr.mxu0 0.0
    %678 = vmatpush1.msra.mxu0 0.0
    %679 = vmatprep.subr.mxu0 0.0
    %680 = vmatpush1.msra.mxu0 0.0
    %681 = vmatprep.subr.mxu0 0.0
    %682 = vmatpush1.msra.mxu0 0.0
    %683 = vmatprep.mubr.f32.mxu0 0.0
    %684 = vmatmul.mubr.f32.gmra.mrb[0].mxu0 %v618
    %v685 = vpop.f32.mrb[0].mxu0
    %v686 = vadd.f32 0.0, %v685
    %v687 = vpop.f32.mrb[0].mxu0
    %688 = vdwg.mxu0
    %v689 = vadd.f32 %v617, %v686
    %690 = vst [vmem:[#allocation4 + $0x2] sm:$0x3] %v689
    %v691 = vld [vmem:[%s4 + $0x180] sm:$0xff]
    %v692 = vld [vmem:[%s4 + $0x188] sm:$0xff]
    %v693 = vld [vmem:[%s4 + $0x190] sm:$0xff]
    %v694 = vld [vmem:[%s4 + $0x198] sm:$0xff]
    %v695 = vld [vmem:[%s4 + $0x1a0] sm:$0xff]
    %v696 = vld [vmem:[%s4 + $0x1a8] sm:$0xff]
    %v697 = vld [vmem:[%s4 + $0x1b0] sm:$0xff]
    %v698 = vld [vmem:[%s4 + $0x1b8] sm:$0xff]
    %v699 = vld [vmem:[%s4 + $0x1c0] sm:$0xff]
    %v700 = vld [vmem:[%s4 + $0x1c8] sm:$0xff]
    %v701 = vld [vmem:[%s4 + $0x1d0] sm:$0xff]
    %v702 = vld [vmem:[%s4 + $0x1d8] sm:$0xff]
    %v703 = vld [vmem:[%s4 + $0x1e0] sm:$0xff]
    %v704 = vld [vmem:[%s4 + $0x1e8] sm:$0xff]
    %v705 = vld [vmem:[%s4 + $0x1f0] sm:$0xff]
    %v706 = vld [vmem:[%s4 + $0x1f8] sm:$0xff]
    %v707 = vld [vmem:[#allocation4] sm:$0x3]
    %v708 = vld [vmem:[#allocation3 + $0x3] sm:$0x3]
    %709 = vmatprep.subr.mxu0 0.0
    %710 = vmatpush1.msra.mxu0 %v691
    %711 = vmatprep.subr.mxu0 0.0
    %712 = vmatpush1.msra.mxu0 %v692
    %713 = vmatprep.subr.mxu0 0.0
    %714 = vmatpush1.msra.mxu0 %v693
    %715 = vmatprep.subr.mxu0 0.0
    %716 = vmatpush1.msra.mxu0 %v694
    %717 = vmatprep.subr.mxu0 0.0
    %718 = vmatpush1.msra.mxu0 %v695
    %719 = vmatprep.subr.mxu0 0.0
    %720 = vmatpush1.msra.mxu0 %v696
    %721 = vmatprep.subr.mxu0 0.0
    %722 = vmatpush1.msra.mxu0 %v697
    %723 = vmatprep.subr.mxu0 0.0
    %724 = vmatpush1.msra.mxu0 %v698
    %725 = vmatprep.subr.mxu0 0.0
    %726 = vmatpush1.msra.mxu0 %v699
    %727 = vmatprep.subr.mxu0 0.0
    %728 = vmatpush1.msra.mxu0 %v700
    %729 = vmatprep.subr.mxu0 0.0
    %730 = vmatpush1.msra.mxu0 %v701
    %731 = vmatprep.subr.mxu0 0.0
    %732 = vmatpush1.msra.mxu0 %v702
    %733 = vmatprep.subr.mxu0 0.0
    %734 = vmatpush1.msra.mxu0 %v703
    %735 = vmatprep.subr.mxu0 0.0
    %736 = vmatpush1.msra.mxu0 %v704
    %737 = vmatprep.subr.mxu0 0.0
    %738 = vmatpush1.msra.mxu0 %v705
    %739 = vmatprep.subr.mxu0 0.0
    %740 = vmatpush1.msra.mxu0 %v706
    %741 = vmatprep.subr.mxu0 0.0
    %742 = vmatpush1.msra.mxu0 0.0
    %743 = vmatprep.subr.mxu0 0.0
    %744 = vmatpush1.msra.mxu0 0.0
    %745 = vmatprep.subr.mxu0 0.0
    %746 = vmatpush1.msra.mxu0 0.0
    %747 = vmatprep.subr.mxu0 0.0
    %748 = vmatpush1.msra.mxu0 0.0
    %749 = vmatprep.subr.mxu0 0.0
    %750 = vmatpush1.msra.mxu0 0.0
    %751 = vmatprep.subr.mxu0 0.0
    %752 = vmatpush1.msra.mxu0 0.0
    %753 = vmatprep.subr.mxu0 0.0
    %754 = vmatpush1.msra.mxu0 0.0
    %755 = vmatprep.subr.mxu0 0.0
    %756 = vmatpush1.msra.mxu0 0.0
    %757 = vmatprep.subr.mxu0 0.0
    %758 = vmatpush1.msra.mxu0 0.0
    %759 = vmatprep.subr.mxu0 0.0
    %760 = vmatpush1.msra.mxu0 0.0
    %761 = vmatprep.subr.mxu0 0.0
    %762 = vmatpush1.msra.mxu0 0.0
    %763 = vmatprep.subr.mxu0 0.0
    %764 = vmatpush1.msra.mxu0 0.0
    %765 = vmatprep.subr.mxu0 0.0
    %766 = vmatpush1.msra.mxu0 0.0
    %767 = vmatprep.subr.mxu0 0.0
    %768 = vmatpush1.msra.mxu0 0.0
    %769 = vmatprep.subr.mxu0 0.0
    %770 = vmatpush1.msra.mxu0 0.0
    %771 = vmatprep.subr.mxu0 0.0
    %772 = vmatpush1.msra.mxu0 0.0
    %773 = vmatprep.mubr.f32.mxu0 0.0
    %774 = vmatmul.mubr.f32.gmra.mrb[0].mxu0 %v708
    %v775 = vpop.f32.mrb[0].mxu0
    %v776 = vadd.f32 0.0, %v775
    %v777 = vpop.f32.mrb[0].mxu0
    %778 = vdwg.mxu0
    %v779 = vadd.f32 %v707, %v776
    %780 = vst [vmem:[#allocation4] sm:$0x3] %v779
    %v781 = vld [vmem:[#allocation4 + $0x2] sm:$0x3]
    %v782 = vld [vmem:[#allocation3 + $0x9] sm:$0x3]
    %783 = vmatprep.subr.mxu0 0.0
    %784 = vmatpush1.msra.mxu0 %v691
    %785 = vmatprep.subr.mxu0 0.0
    %786 = vmatpush1.msra.mxu0 %v692
    %787 = vmatprep.subr.mxu0 0.0
    %788 = vmatpush1.msra.mxu0 %v693
    %789 = vmatprep.subr.mxu0 0.0
    %790 = vmatpush1.msra.mxu0 %v694
    %791 = vmatprep.subr.mxu0 0.0
    %792 = vmatpush1.msra.mxu0 %v695
    %793 = vmatprep.subr.mxu0 0.0
    %794 = vmatpush1.msra.mxu0 %v696
    %795 = vmatprep.subr.mxu0 0.0
    %796 = vmatpush1.msra.mxu0 %v697
    %797 = vmatprep.subr.mxu0 0.0
    %798 = vmatpush1.msra.mxu0 %v698
    %799 = vmatprep.subr.mxu0 0.0
    %800 = vmatpush1.msra.mxu0 %v699
    %801 = vmatprep.subr.mxu0 0.0
    %802 = vmatpush1.msra.mxu0 %v700
    %803 = vmatprep.subr.mxu0 0.0
    %804 = vmatpush1.msra.mxu0 %v701
    %805 = vmatprep.subr.mxu0 0.0
    %806 = vmatpush1.msra.mxu0 %v702
    %807 = vmatprep.subr.mxu0 0.0
    %808 = vmatpush1.msra.mxu0 %v703
    %809 = vmatprep.subr.mxu0 0.0
    %810 = vmatpush1.msra.mxu0 %v704
    %811 = vmatprep.subr.mxu0 0.0
    %812 = vmatpush1.msra.mxu0 %v705
    %813 = vmatprep.subr.mxu0 0.0
    %814 = vmatpush1.msra.mxu0 %v706
    %815 = vmatprep.subr.mxu0 0.0
    %816 = vmatpush1.msra.mxu0 0.0
    %817 = vmatprep.subr.mxu0 0.0
    %818 = vmatpush1.msra.mxu0 0.0
    %819 = vmatprep.subr.mxu0 0.0
    %820 = vmatpush1.msra.mxu0 0.0
    %821 = vmatprep.subr.mxu0 0.0
    %822 = vmatpush1.msra.mxu0 0.0
    %823 = vmatprep.subr.mxu0 0.0
    %824 = vmatpush1.msra.mxu0 0.0
    %825 = vmatprep.subr.mxu0 0.0
    %826 = vmatpush1.msra.mxu0 0.0
    %827 = vmatprep.subr.mxu0 0.0
    %828 = vmatpush1.msra.mxu0 0.0
    %829 = vmatprep.subr.mxu0 0.0
    %830 = vmatpush1.msra.mxu0 0.0
    %831 = vmatprep.subr.mxu0 0.0
    %832 = vmatpush1.msra.mxu0 0.0
    %833 = vmatprep.subr.mxu0 0.0
    %834 = vmatpush1.msra.mxu0 0.0
    %835 = vmatprep.subr.mxu0 0.0
    %836 = vmatpush1.msra.mxu0 0.0
    %837 = vmatprep.subr.mxu0 0.0
    %838 = vmatpush1.msra.mxu0 0.0
    %839 = vmatprep.subr.mxu0 0.0
    %840 = vmatpush1.msra.mxu0 0.0
    %841 = vmatprep.subr.mxu0 0.0
    %842 = vmatpush1.msra.mxu0 0.0
    %843 = vmatprep.subr.mxu0 0.0
    %844 = vmatpush1.msra.mxu0 0.0
    %845 = vmatprep.subr.mxu0 0.0
    %846 = vmatpush1.msra.mxu0 0.0
    %847 = vmatprep.mubr.f32.mxu0 0.0
    %848 = vmatmul.mubr.f32.gmra.mrb[0].mxu0 %v782
    %v849 = vpop.f32.mrb[0].mxu0
    %v850 = vadd.f32 0.0, %v849
    %v851 = vpop.f32.mrb[0].mxu0
    %852 = vdwg.mxu0
    %v853 = vadd.f32 %v781, %v850
    %854 = vst [vmem:[#allocation4 + $0x2] sm:$0x3] %v853
    %v855 = vld [vmem:[%s4 + $0x200] sm:$0xff]
    %v856 = vld [vmem:[%s4 + $0x208] sm:$0xff]
    %v857 = vld [vmem:[%s4 + $0x210] sm:$0xff]
    %v858 = vld [vmem:[%s4 + $0x218] sm:$0xff]
    %v859 = vld [vmem:[%s4 + $0x220] sm:$0xff]
    %v860 = vld [vmem:[%s4 + $0x228] sm:$0xff]
    %v861 = vld [vmem:[%s4 + $0x230] sm:$0xff]
    %v862 = vld [vmem:[%s4 + $0x238] sm:$0xff]
    %v863 = vld [vmem:[%s4 + $0x240] sm:$0xff]
    %v864 = vld [vmem:[%s4 + $0x248] sm:$0xff]
    %v865 = vld [vmem:[%s4 + $0x250] sm:$0xff]
    %v866 = vld [vmem:[%s4 + $0x258] sm:$0xff]
    %v867 = vld [vmem:[%s4 + $0x260] sm:$0xff]
    %v868 = vld [vmem:[%s4 + $0x268] sm:$0xff]
    %v869 = vld [vmem:[%s4 + $0x270] sm:$0xff]
    %v870 = vld [vmem:[%s4 + $0x278] sm:$0xff]
    %v871 = vld [vmem:[#allocation4] sm:$0x3]
    %v872 = vld [vmem:[#allocation3 + $0x4] sm:$0x3]
    %873 = vmatprep.subr.mxu0 0.0
    %874 = vmatpush1.msra.mxu0 %v855
    %875 = vmatprep.subr.mxu0 0.0
    %876 = vmatpush1.msra.mxu0 %v856
    %877 = vmatprep.subr.mxu0 0.0
    %878 = vmatpush1.msra.mxu0 %v857
    %879 = vmatprep.subr.mxu0 0.0
    %880 = vmatpush1.msra.mxu0 %v858
    %881 = vmatprep.subr.mxu0 0.0
    %882 = vmatpush1.msra.mxu0 %v859
    %883 = vmatprep.subr.mxu0 0.0
    %884 = vmatpush1.msra.mxu0 %v860
    %885 = vmatprep.subr.mxu0 0.0
    %886 = vmatpush1.msra.mxu0 %v861
    %887 = vmatprep.subr.mxu0 0.0
    %888 = vmatpush1.msra.mxu0 %v862
    %889 = vmatprep.subr.mxu0 0.0
    %890 = vmatpush1.msra.mxu0 %v863
    %891 = vmatprep.subr.mxu0 0.0
    %892 = vmatpush1.msra.mxu0 %v864
    %893 = vmatprep.subr.mxu0 0.0
    %894 = vmatpush1.msra.mxu0 %v865
    %895 = vmatprep.subr.mxu0 0.0
    %896 = vmatpush1.msra.mxu0 %v866
    %897 = vmatprep.subr.mxu0 0.0
    %898 = vmatpush1.msra.mxu0 %v867
    %899 = vmatprep.subr.mxu0 0.0
    %900 = vmatpush1.msra.mxu0 %v868
    %901 = vmatprep.subr.mxu0 0.0
    %902 = vmatpush1.msra.mxu0 %v869
    %903 = vmatprep.subr.mxu0 0.0
    %904 = vmatpush1.msra.mxu0 %v870
    %905 = vmatprep.subr.mxu0 0.0
    %906 = vmatpush1.msra.mxu0 0.0
    %907 = vmatprep.subr.mxu0 0.0
    %908 = vmatpush1.msra.mxu0 0.0
    %909 = vmatprep.subr.mxu0 0.0
    %910 = vmatpush1.msra.mxu0 0.0
    %911 = vmatprep.subr.mxu0 0.0
    %912 = vmatpush1.msra.mxu0 0.0
    %913 = vmatprep.subr.mxu0 0.0
    %914 = vmatpush1.msra.mxu0 0.0
    %915 = vmatprep.subr.mxu0 0.0
    %916 = vmatpush1.msra.mxu0 0.0
    %917 = vmatprep.subr.mxu0 0.0
    %918 = vmatpush1.msra.mxu0 0.0
    %919 = vmatprep.subr.mxu0 0.0
    %920 = vmatpush1.msra.mxu0 0.0
    %921 = vmatprep.subr.mxu0 0.0
    %922 = vmatpush1.msra.mxu0 0.0
    %923 = vmatprep.subr.mxu0 0.0
    %924 = vmatpush1.msra.mxu0 0.0
    %925 = vmatprep.subr.mxu0 0.0
    %926 = vmatpush1.msra.mxu0 0.0
    %927 = vmatprep.subr.mxu0 0.0
    %928 = vmatpush1.msra.mxu0 0.0
    %929 = vmatprep.subr.mxu0 0.0
    %930 = vmatpush1.msra.mxu0 0.0
    %931 = vmatprep.subr.mxu0 0.0
    %932 = vmatpush1.msra.mxu0 0.0
    %933 = vmatprep.subr.mxu0 0.0
    %934 = vmatpush1.msra.mxu0 0.0
    %935 = vmatprep.subr.mxu0 0.0
    %936 = vmatpush1.msra.mxu0 0.0
    %937 = vmatprep.mubr.f32.mxu0 0.0
    %938 = vmatmul.mubr.f32.gmra.mrb[0].mxu0 %v872
    %v939 = vpop.f32.mrb[0].mxu0
    %v940 = vadd.f32 0.0, %v939
    %v941 = vpop.f32.mrb[0].mxu0
    %942 = vdwg.mxu0
    %v943 = vadd.f32 %v871, %v940
    %944 = vst [vmem:[#allocation4] sm:$0x3] %v943
    %v945 = vld [vmem:[#allocation4 + $0x2] sm:$0x3]
    %v946 = vld [vmem:[#allocation3 + $0xa] sm:$0x3]
    %947 = vmatprep.subr.mxu0 0.0
    %948 = vmatpush1.msra.mxu0 %v855
    %949 = vmatprep.subr.mxu0 0.0
    %950 = vmatpush1.msra.mxu0 %v856
    %951 = vmatprep.subr.mxu0 0.0
    %952 = vmatpush1.msra.mxu0 %v857
    %953 = vmatprep.subr.mxu0 0.0
    %954 = vmatpush1.msra.mxu0 %v858
    %955 = vmatprep.subr.mxu0 0.0
    %956 = vmatpush1.msra.mxu0 %v859
    %957 = vmatprep.subr.mxu0 0.0
    %958 = vmatpush1.msra.mxu0 %v860
    %959 = vmatprep.subr.mxu0 0.0
    %960 = vmatpush1.msra.mxu0 %v861
    %961 = vmatprep.subr.mxu0 0.0
    %962 = vmatpush1.msra.mxu0 %v862
    %963 = vmatprep.subr.mxu0 0.0
    %964 = vmatpush1.msra.mxu0 %v863
    %965 = vmatprep.subr.mxu0 0.0
    %966 = vmatpush1.msra.mxu0 %v864
    %967 = vmatprep.subr.mxu0 0.0
    %968 = vmatpush1.msra.mxu0 %v865
    %969 = vmatprep.subr.mxu0 0.0
    %970 = vmatpush1.msra.mxu0 %v866
    %971 = vmatprep.subr.mxu0 0.0
    %972 = vmatpush1.msra.mxu0 %v867
    %973 = vmatprep.subr.mxu0 0.0
    %974 = vmatpush1.msra.mxu0 %v868
    %975 = vmatprep.subr.mxu0 0.0
    %976 = vmatpush1.msra.mxu0 %v869
    %977 = vmatprep.subr.mxu0 0.0
    %978 = vmatpush1.msra.mxu0 %v870
    %979 = vmatprep.subr.mxu0 0.0
    %980 = vmatpush1.msra.mxu0 0.0
    %981 = vmatprep.subr.mxu0 0.0
    %982 = vmatpush1.msra.mxu0 0.0
    %983 = vmatprep.subr.mxu0 0.0
    %984 = vmatpush1.msra.mxu0 0.0
    %985 = vmatprep.subr.mxu0 0.0
    %986 = vmatpush1.msra.mxu0 0.0
    %987 = vmatprep.subr.mxu0 0.0
    %988 = vmatpush1.msra.mxu0 0.0
    %989 = vmatprep.subr.mxu0 0.0
    %990 = vmatpush1.msra.mxu0 0.0
    %991 = vmatprep.subr.mxu0 0.0
    %992 = vmatpush1.msra.mxu0 0.0
    %993 = vmatprep.subr.mxu0 0.0
    %994 = vmatpush1.msra.mxu0 0.0
    %995 = vmatprep.subr.mxu0 0.0
    %996 = vmatpush1.msra.mxu0 0.0
    %997 = vmatprep.subr.mxu0 0.0
    %998 = vmatpush1.msra.mxu0 0.0
    %999 = vmatprep.subr.mxu0 0.0
    %1000 = vmatpush1.msra.mxu0 0.0
    %1001 = vmatprep.subr.mxu0 0.0
    %1002 = vmatpush1.msra.mxu0 0.0
    %1003 = vmatprep.subr.mxu0 0.0
    %1004 = vmatpush1.msra.mxu0 0.0
    %1005 = vmatprep.subr.mxu0 0.0
    %1006 = vmatpush1.msra.mxu0 0.0
    %1007 = vmatprep.subr.mxu0 0.0
    %1008 = vmatpush1.msra.mxu0 0.0
    %1009 = vmatprep.subr.mxu0 0.0
    %1010 = vmatpush1.msra.mxu0 0.0
    %1011 = vmatprep.mubr.f32.mxu0 0.0
    %1012 = vmatmul.mubr.f32.gmra.mrb[0].mxu0 %v946
    %v1013 = vpop.f32.mrb[0].mxu0
    %v1014 = vadd.f32 0.0, %v1013
    %v1015 = vpop.f32.mrb[0].mxu0
    %1016 = vdwg.mxu0
    %v1017 = vadd.f32 %v945, %v1014
    %1018 = vst [vmem:[#allocation4 + $0x2] sm:$0x3] %v1017
    %v1019 = vld [vmem:[#allocation4] sm:$0xf]
    %vm1020 = vcmask 1043456
    %v1021 = vsel %vm1020, %v1019, 0.0
    %v1022 = vrot.slane %v1021, 4
    %v1023 = vadd.f32 %v1021, %v1022
    %v1024 = vrot.slane %v1023, 2
    %v1025 = vadd.f32 %v1023, %v1024
    %v1026 = vrot.slane %v1025, 1
    %v1027 = vadd.f32 %v1025, %v1026
    %v1028 = vmul.f32 %v1019, %v1019
    %v1029 = vsel %vm1020, %v1028, 0.0
    %v1030 = vrot.slane %v1029, 4
    %v1031 = vadd.f32 %v1029, %v1030
    %v1032 = vrot.slane %v1031, 2
    %v1033 = vadd.f32 %v1031, %v1032
    %v1034 = vrot.slane %v1033, 1
    %v1035 = vadd.f32 %v1033, %v1034
    %v1036 = vmul.f32 %v1027, 0.25
    %v1037 = vmul.f32 %v1035, 0.25
    %v1038 = vmul.f32 %v1036, %v1036
    %v1039 = vsub.f32 %v1037, %v1038
    %v1040 = vmax.f32 %v1039, 0.0
    %v1041 = vld [vmem:[%s5] sm:$0x1]
    %v1042 = vadd.f32 %v1040, 1e-05
    %v1043 = vrsqrt.pop %v1042
    %v1044 = vmul.f32 %v1041, %v1043
    %v1045 = vld [vmem:[%s6] sm:$0x1]
    %v1046 = vmul.f32 %v1036, %v1044
    %v1047 = vsub.f32 %v1045, %v1046
    %v1049 = vlaneseq
    %v1050 = vshrl.u32 %v1049, 7
    %v1051 = vsub.s32 0, %v1050
    %v1052 = vrot.slane %v1044, %v1051
    %v1054 = vmul.f32 %v1019, %v1052
    %v1056 = vlaneseq
    %v1057 = vshrl.u32 %v1056, 7
    %v1058 = vsub.s32 0, %v1057
    %v1059 = vrot.slane %v1047, %v1058
    %v1061 = vadd.f32 %v1054, %v1059
    %v1062 = vmax.f32 %v1061, 0.0
    %1063 = vst [vmem:[#allocation4] sm:$0xf] %v1062
    %v1064 = vld [vmem:[#allocation4] ss:$2 sm:$0x3]
    %s1065 = scalar_lea.vmem [#allocation4], 1
    %v1066 = vld [vmem:[%s1065] ss:$2 sm:$0x3]
    %v1067 = vmax.f32 %v1064, %v1066
    %1068 = vst [vmem:[#allocation5] sm:$0x3] %v1067
    // Predicated region
    $region30: #{temporal_conv_forward.1} parent=1 // pred_check
      _
    $region31: #{temporal_conv_forward.1} parent=1 // pred_check_branch
      %1070 = sbr.rel (0) target = $region33
    $region32: #{temporal_conv_forward.1} parent=1 // pred_region
      %s1072 = ssub.s32 32, 32
      %1073 = vsyncadd [#allocation6], %s1072
      %s1075 = sshll.u32 [#allocation5], 4
      %s1076 = int_to_ptr.vmem [resolvable:$true] %s1075
      %1078 = dma.vmem_to_hbm [thread:$0]  %s1076, 32, %s7, [#allocation6]
    $region33: #{temporal_conv_forward.1} parent=1 // pred_fallthru
      _
    // Predicated region
    $region34: #{temporal_conv_forward.1} parent=1 // pred_check
      _
    $region35: #{temporal_conv_forward.1} parent=1 // pred_check_branch
      %1080 = sbr.rel (0) target = $region37
    $region36: #{temporal_conv_forward.1} parent=1 // pred_region
      %1081 = dma.done [#allocation6], 32
    $region37: #{temporal_conv_forward.1} parent=1 // pred_fallthru
      _
    %1082 = vsyncpa [#allocation6], 1

</llo_original>
